<compile_context>
chip_gen: v7x
topology: tpu7x:2x2x1
jax: 0.10.0
libtpu: 0.0.40
codegen_flags: <defaults>
</compile_context>

<pallas_src>
import functools

import jax
import jax.numpy as jnp
from jax import lax
from jax.experimental import pallas as pl
from jax.experimental.pallas import tpu as pltpu

# ---- PALM hyper-parameters (module __init__ defaults, scaled-down n_protos) ----
NUM_CLASSES  = 2
N_PROTOS     = 16
CACHE_SIZE   = N_PROTOS // NUM_CLASSES
K_TOPK       = min(5, CACHE_SIZE)
FEAT_DIM     = 128
NVIEWS       = 1          # nviews>1 makes the original proto_class_counts matmul ill-shaped
PROTO_M      = 0.99
TEMP         = 0.1
LAMBDA_PCON  = 1.0
EPSILON      = 0.05
SINKHORN_ITS = 3
CONTRA_TEMP  = 0.5
BATCH        = 16

USE_BF16_MATMUL = False   # keep exact fp32 parity with the torch reference by default


# ------------------------- in-kernel helpers -------------------------
def _mm_nt(a, b):
    # a @ b.T with fp32 accumulation on the MXU
    if USE_BF16_MATMUL:
        a = a.astype(jnp.bfloat16)
        b = b.astype(jnp.bfloat16)
    return lax.dot_general(a, b, (((1,), (1,)), ((), ())),
                           preferred_element_type=jnp.float32)


def _mm_tn(a, b):
    # a.T @ b with fp32 accumulation on the MXU
    if USE_BF16_MATMUL:
        a = a.astype(jnp.bfloat16)
        b = b.astype(jnp.bfloat16)
    return lax.dot_general(a, b, (((0,), (0,)), ((), ())),
                           preferred_element_type=jnp.float32)


def _l1_normalize(x, axis):
    # F.normalize(x, dim=axis, p=1), eps=1e-12 — exact fp32 division.
    s = jnp.maximum(jnp.sum(jnp.abs(x), axis=axis, keepdims=True), 1e-12)
    return x / s


def _l2_normalize(x, axis):
    # F.normalize(x, dim=axis, p=2), eps=1e-12; rsqrt on the EUP.
    ss = jnp.maximum(jnp.sum(x * x, axis=axis, keepdims=True), 1e-24)
    return x * lax.rsqrt(ss)


def _sinkhorn(out_sim):
    """Sinkhorn from the precomputed similarity out = features @ protos.T.

    torch keeps Q = exp(out/eps).T of shape [P, N]; we keep the transpose
    [N, P], so torch dim=1 -> axis=0 here and dim=0 -> axis=1.  The global
    /sum_Q prescale and the constant /K, /B, *B factors cancel exactly under
    the scale-invariant L1 normalizations, so only the two alternating
    normalizations per iteration remain.
    """
    # TODO(synk): the torch isinf(sum_Q) fallback calls a nonexistent self.ws; skipped.
    qt = jnp.exp(out_sim * (1.0 / EPSILON))
    for _ in range(SINKHORN_ITS):
        qt = _l1_normalize(qt, axis=0)   # F.normalize(Q, dim=1, p=1)
        qt = _l1_normalize(qt, axis=1)   # F.normalize(Q, dim=0, p=1)
    return qt


def _topk_indicator(um, support_mask, k, support_size):
    """0/1 indicator of the k largest entries of every row of `um`
    (== torch.scatter(zeros, 1, torch.topk(um, k, dim=1).indices, 1)),
    smallest-index tie-break.

    `um` is nonnegative, strictly positive exactly on `support_mask`
    (`support_size` entries per row, k <= support_size) and zero elsewhere.
    The IEEE bits of a nonnegative f32 are monotone as int32, so the value
    and the tie-break column index are fused into one int32 key and each
    selection step is a SINGLE XLU row-reduce.  When the complement is
    smaller (support_size - k < k) we select the (support_size - k) smallest
    support entries instead and invert, shortening the serial reduce chain.
    """
    n, p = um.shape
    if k <= 0:
        return jnp.zeros_like(um)
    if k >= support_size:
        return support_mask

    cols = lax.broadcasted_iota(jnp.int32, um.shape, 1)
    idx_bits = max(1, (p - 1).bit_length())
    low_mask = (1 << idx_bits) - 1
    vbits = pltpu.bitcast(um, jnp.int32)                 # monotone for um >= 0
    key = (vbits & (~low_mask)) | (p - 1 - cols)         # distinct keys per row

    m = support_size - k
    if m < k:
        # Complement selection: pick the m smallest SUPPORT entries, invert.
        # Ties go to the larger column here, i.e. the top-k keeps the smaller
        # column — consistent with the direct path's tie-break.
        int_max = jnp.iinfo(jnp.int32).max
        key = jnp.where(support_mask > 0, key, int_max)
        picked = jnp.zeros_like(um)
        for _ in range(m):
            rowmin = jnp.min(key, axis=1, keepdims=True)   # single XLU reduce
            pick = key == rowmin                           # exactly one per row
            picked = jnp.where(pick, 1.0, picked)
            key = jnp.where(pick, int_max, key)
        return support_mask - picked

    int_min = jnp.iinfo(jnp.int32).min
    picked = jnp.zeros_like(um)
    for _ in range(k):
        rowmax = jnp.max(key, axis=1, keepdims=True)       # single XLU reduce
        pick = key == rowmax
        picked = jnp.where(pick, 1.0, picked)
        key = jnp.where(pick, int_min, key)
    return picked


# ------------------------------ kernel ------------------------------
def _palm_kernel(feat_ref, protos_ref, countsT_ref, trow_ref,
                 scalars_ref, new_protos_ref, new_countsT_ref,
                 *, update_prototypes):
    f        = feat_ref[...]         # [N, D] f32
    protos   = protos_ref[...]       # [P, D] f32
    counts_t = countsT_ref[...]      # [C, P] f32 (transposed proto_class_counts)
    t_row    = trow_ref[...]         # [1, N] i32 (targets repeated nviews times)

    n = f.shape[0]
    p = protos.shape[0]
    c = counts_t.shape[0]

    # ---- targets / masks (single lane-dense target row; column form derived
    #      in-kernel via a masked diagonal reduce — no 1xN -> Nx1 relayout) ----
    t_row_f = t_row.astype(jnp.float32)                                     # [1, N]
    row_i = lax.broadcasted_iota(jnp.int32, (n, n), 0)
    col_i = lax.broadcasted_iota(jnp.int32, (n, n), 1)
    eye = row_i == col_i
    t_col_f = jnp.sum(jnp.where(eye, jnp.broadcast_to(t_row_f, (n, n)), 0.0),
                      axis=1, keepdims=True)                                # [N, 1]

    # prototype class of column j is (j % C): torch.arange(C).repeat(cache_size).
    proto_idx = lax.broadcasted_iota(jnp.int32, (1, p), 1).astype(jnp.float32)
    c_f = jnp.float32(c)
    p_cls_f = proto_idx - jnp.floor(proto_idx / c_f) * c_f                  # [1, P]
    mask = (t_col_f == p_cls_f).astype(jnp.float32)                         # [N, P]

    # ---- fused first matmul: proto similarities AND the contrastive Gram ----
    pf = jnp.concatenate([protos, f], axis=0)                               # [P+N, D]
    out_both = _mm_nt(f, pf)                                                # [N, P+N]
    out1 = out_both[:, :p]                                                  # f @ protos.T
    gram = out_both[:, p:]                                                  # f @ f.T

    # ------------------------- mle_loss -------------------------
    q1 = _sinkhorn(out1)

    um = mask * q1
    if K_TOPK > 0:
        tk = _topk_indicator(um, mask, K_TOPK, CACHE_SIZE)   # computed once, reused below
        um = tk * um
    um = _l1_normalize(_l1_normalize(um, axis=1), axis=0)

    upd_feat = _mm_tn(um, f)                                 # update_mask.T @ features -> [P, D]

    if update_prototypes:
        # counts update as per-class masked column sums on the VPU/XLU
        # (no tiny MXU matmul); built directly in the transposed [C, P] layout.
        sub_idx = lax.broadcasted_iota(jnp.int32, (c, p), 0)
        upd_t = jnp.zeros((c, p), jnp.float32)
        for cls in range(c):
            m_c = (t_col_f == jnp.float32(cls)).astype(jnp.float32)         # [N, 1]
            s_c = jnp.sum(um * m_c, axis=0, keepdims=True)                  # [1, P]
            upd_t = jnp.where(sub_idx == cls, s_c, upd_t)
        new_counts_t = counts_t + upd_t
        new_protos = _l2_normalize(PROTO_M * protos + (1.0 - PROTO_M) * upd_feat, axis=1)
    else:
        new_counts_t = counts_t
        new_protos = protos

    # second sinkhorn and the logits share ONE matmul against the new prototypes
    out2 = _mm_nt(f, new_protos)                             # [N, P]
    q2 = _sinkhorn(out2)
    logits = out2 * (1.0 / TEMP)

    if K_TOPK > 0:
        # torch re-topk's the doubly L1-normalized update_mask; the positive
        # row/column rescaling preserves its support (exactly K_TOPK positives
        # per row), so the re-topk selects the identical set -> reuse tk.
        loss_mask = _l1_normalize(tk * (mask * q2), axis=1)
    else:
        loss_mask = _l1_normalize(mask * q2, axis=1)
    masked_logits = loss_mask * logits

    pos = jnp.sum(masked_logits, axis=1, keepdims=True)                     # [N, 1]
    row_max = jnp.max(logits, axis=1, keepdims=True)
    neg = row_max + jnp.log(jnp.sum(jnp.exp(logits - row_max), axis=1, keepdims=True))
    # torch: -mean(pos - neg) with pos [N] and neg [N,1] broadcasting to [N,N];
    # that mean equals mean(neg) - mean(pos).
    mle = jnp.mean(neg) - jnp.mean(pos)

    # ---------------------- proto_contra ------------------------
    # fn @ fn.T == diag(r) (f @ f.T) diag(r); the row norms are the Gram diagonal,
    # extracted with two masked reduces (no separate f*f reduce, no second matmul).
    diag = jnp.where(eye, gram, 0.0)
    ss_col = jnp.sum(diag, axis=1, keepdims=True)                           # [N, 1] ||f_i||^2
    ss_row = jnp.sum(diag, axis=0, keepdims=True)                           # [1, N]
    r_col = lax.rsqrt(jnp.maximum(ss_col, 1e-24))
    r_row = lax.rsqrt(jnp.maximum(ss_row, 1e-24))
    adc = gram * (r_col * r_row) * (1.0 / CONTRA_TEMP)                      # [N, N]

    logits_c = adc - jnp.max(adc, axis=1, keepdims=True)
    logits_mask = jnp.where(eye, 0.0, 1.0)
    cls_mask = (t_col_f == t_row_f).astype(jnp.float32) * logits_mask
    exp_l = jnp.exp(logits_c) * logits_mask
    lse = jnp.log(jnp.sum(exp_l, axis=1, keepdims=True) + 1e-6)             # [N, 1]
    msum = jnp.maximum(jnp.sum(cls_mask, axis=1, keepdims=True), 1e-6)      # [N, 1]
    pos_c = jnp.sum(cls_mask * logits_c, axis=1, keepdims=True) / msum
    pcon = -jnp.mean(pos_c - lse)

    g_dis = LAMBDA_PCON * pcon
    total = mle + g_dis

    new_protos_ref[...] = new_protos
    new_countsT_ref[...] = new_counts_t

    # single lane-dense scalar row: [total, mle, lambda*pcon, 0, ...]
    lane = lax.broadcasted_iota(jnp.int32, scalars_ref.shape, 1)
    scalars_ref[...] = jnp.where(lane == 0, total,
                        jnp.where(lane == 1, mle,
                         jnp.where(lane == 2, g_dis, 0.0)))


# ------------------------------ wrapper ------------------------------
@functools.partial(jax.jit, static_argnames=("update_prototypes",))
def _palm_forward_jit(features, targets_rep, protos, proto_class_counts_t,
                      *, update_prototypes=True):
    n, d = features.shape
    p = protos.shape[0]
    c = proto_class_counts_t.shape[0]

    feats = features.astype(jnp.float32)
    protos_f = protos.astype(jnp.float32)
    counts_t = proto_class_counts_t.astype(jnp.float32)          # persistent [C, P] layout
    t_row = targets_rep.reshape(1, n).astype(jnp.int32)          # single lane-dense row

    out_shapes = (
        jax.ShapeDtypeStruct((1, 128), jnp.float32),   # [loss, mle, lambda*pcon, pad...]
        jax.ShapeDtypeStruct((p, d), jnp.float32),     # updated prototypes (aliased)
        jax.ShapeDtypeStruct((c, p), jnp.float32),     # updated counts, [C, P] (aliased)
    )

    kernel = functools.partial(_palm_kernel, update_prototypes=update_prototypes)

    # Grid-less call: one full-array block per operand, no pipeline scaffolding.
    scalars, new_protos, new_counts_t = pl.pallas_call(
        kernel,
        out_shape=out_shapes,
        input_output_aliases={1: 1, 2: 2},   # protos -> new_protos, counts_T -> new_counts_T
    )(feats, protos_f, counts_t, t_row)

    loss = scalars[0, 0]
    mle = scalars[0, 1]
    pcon = scalars[0, 2]
    return loss, mle, pcon, new_protos, new_counts_t


def palm_forward(features, targets_rep, protos, proto_class_counts_t,
                 update_prototypes=True):
    """features: [N, feat_dim] f32, targets_rep: [N] int (targets.repeat(nviews)),
    protos: [n_protos, feat_dim] f32,
    proto_class_counts_t: [num_classes, n_protos] f32 — the module's
    proto_class_counts buffer kept transposed across steps (lane-dense, so the
    in-kernel alias reuses the persistent buffer with no per-call transposes).
    """
    loss, mle, pcon, new_protos, new_counts_t = _palm_forward_jit(
        features, targets_rep, protos, proto_class_counts_t,
        update_prototypes=update_prototypes)
    # device scalars (no host sync); caller can .item() lazily if needed.
    loss_dict = {"mle": mle, "proto_contra": pcon}
    return loss, loss_dict, new_protos, new_counts_t


if __name__ == "__main__":
    key = jax.random.PRNGKey(0)
    kf, kt, kp = jax.random.split(key, 3)

    n_samples = BATCH * NVIEWS  # nviews = 1
    # deterministic "encoder output" embeddings (PALM expects L2-normalized features)
    features = jax.random.normal(kf, (n_samples, FEAT_DIM), dtype=jnp.float32)
    features = features / jnp.linalg.norm(features, axis=1, keepdims=True)
    targets = jax.random.randint(kt, (BATCH,), 0, NUM_CLASSES, dtype=jnp.int32)
    targets_rep = jnp.tile(targets, NVIEWS)       # targets.repeat(nviews)

    # buffer init: protos = normalize(randn); counts kept transposed [C, P] across steps
    protos = jax.random.normal(kp, (N_PROTOS, FEAT_DIM), dtype=jnp.float32)
    protos = protos / jnp.linalg.norm(protos, axis=1, keepdims=True)
    proto_class_counts_t = jnp.zeros((NUM_CLASSES, N_PROTOS), dtype=jnp.float32)

    loss, loss_dict, new_protos, new_counts_t = palm_forward(
        features, targets_rep, protos, proto_class_counts_t, update_prototypes=True)

    jax.block_until_ready((loss, loss_dict, new_protos, new_counts_t))
    assert bool(jnp.isfinite(loss))
    assert bool(jnp.isfinite(loss_dict["mle"])) and bool(jnp.isfinite(loss_dict["proto_contra"]))
    assert new_protos.shape == (N_PROTOS, FEAT_DIM)
    assert new_counts_t.shape == (NUM_CLASSES, N_PROTOS)
    assert new_counts_t.T.shape == (N_PROTOS, NUM_CLASSES)   # module-view of the counts buffer
    print("KERNEL_OK")
</pallas_src>

<mosaic_0001>
module attributes {stable_mosaic.version = 11 : i64} {
  func.func @_palm_kernel(%arg0: memref<16x128xf32, #tpu.memory_space<vmem>>, %arg1: memref<16x128xf32, #tpu.memory_space<vmem>>, %arg2: memref<2x16xf32, #tpu.memory_space<vmem>>, %arg3: memref<1x16xi32, #tpu.memory_space<vmem>>, %arg4: memref<1x128xf32, #tpu.memory_space<vmem>>, %arg5: memref<16x128xf32, #tpu.memory_space<vmem>>, %arg6: memref<2x16xf32, #tpu.memory_space<vmem>>) attributes {dimension_semantics = [], scalar_prefetch = 0 : i64, scratch_operands = 0 : i64, tpu.core_type = #tpu.core_type<tc>} {
    %c0 = arith.constant 0 : index
    %c0_0 = arith.constant 0 : index
    %0 = vector.load %arg0[%c0, %c0_0] : memref<16x128xf32, #tpu.memory_space<vmem>>, vector<16x128xf32>
    %c0_1 = arith.constant 0 : index
    %c0_2 = arith.constant 0 : index
    %1 = vector.load %arg1[%c0_1, %c0_2] : memref<16x128xf32, #tpu.memory_space<vmem>>, vector<16x128xf32>
    %c0_3 = arith.constant 0 : index
    %c0_4 = arith.constant 0 : index
    %2 = vector.load %arg2[%c0_3, %c0_4] : memref<2x16xf32, #tpu.memory_space<vmem>>, vector<2x16xf32>
    %c0_5 = arith.constant 0 : index
    %c0_6 = arith.constant 0 : index
    %3 = vector.load %arg3[%c0_5, %c0_6] : memref<1x16xi32, #tpu.memory_space<vmem>>, vector<1x16xi32>
    %4 = arith.sitofp %3 : vector<1x16xi32> to vector<1x16xf32>
    %5 = tpu.iota {dimensions = array<i32: 0>} : vector<16x16xi32>
    %6 = tpu.iota {dimensions = array<i32: 1>} : vector<16x16xi32>
    %7 = arith.cmpi eq, %5, %6 : vector<16x16xi32>
    %8 = vector.shape_cast %4 : vector<1x16xf32> to vector<1x16xf32>
    %9 = vector.broadcast %8 : vector<1x16xf32> to vector<16x16xf32>
    %cst = arith.constant 0.000000e+00 : f32
    %10 = vector.broadcast %cst : f32 to vector<16x16xf32>
    %11 = arith.select %7, %9, %10 : vector<16x16xi1>, vector<16x16xf32>
    %cst_7 = arith.constant dense<0.000000e+00> : vector<16xf32>
    %12 = vector.multi_reduction <add>, %11, %cst_7 [1] : vector<16x16xf32> to vector<16xf32>
    %13 = vector.shape_cast %12 : vector<16xf32> to vector<16x1xf32>
    %14 = tpu.iota {dimensions = array<i32: 1>} : vector<1x16xi32>
    %15 = arith.sitofp %14 : vector<1x16xi32> to vector<1x16xf32>
    %cst_8 = arith.constant 2.000000e+00 : f32
    %16 = vector.broadcast %cst_8 : f32 to vector<1x16xf32>
    %17 = arith.divf %15, %16 : vector<1x16xf32>
    %18 = math.floor %17 : vector<1x16xf32>
    %cst_9 = arith.constant 2.000000e+00 : f32
    %19 = vector.broadcast %cst_9 : f32 to vector<1x16xf32>
    %20 = arith.mulf %18, %19 : vector<1x16xf32>
    %21 = arith.subf %15, %20 : vector<1x16xf32>
    %22 = vector.broadcast %13 : vector<16x1xf32> to vector<16x16xf32>
    %23 = vector.broadcast %21 : vector<1x16xf32> to vector<16x16xf32>
    %24 = arith.cmpf oeq, %22, %23 : vector<16x16xf32>
    %25 = arith.extui %24 : vector<16x16xi1> to vector<16x16xi32>
    %26 = arith.sitofp %25 : vector<16x16xi32> to vector<16x16xf32>
    %27 = tpu.concatenate %1, %0 in 0 : vector<16x128xf32>, vector<16x128xf32> -> vector<32x128xf32>
    %cst_10 = arith.constant dense<0.000000e+00> : vector<16x32xf32>
    %28 = tpu.matmul %0, %27, %cst_10 {dimension_numbers = #tpu.dot_dimension_numbers<[1], [1], [0], [0], [0, 0, 1, 0], [], []>} : vector<16x128xf32>, vector<32x128xf32>, vector<16x32xf32> -> vector<16x32xf32>
    %29 = vector.extract_strided_slice %28 {offsets = [0, 0], sizes = [16, 16], strides = [1, 1]} : vector<16x32xf32> to vector<16x16xf32>
    %30 = vector.extract_strided_slice %28 {offsets = [0, 16], sizes = [16, 16], strides = [1, 1]} : vector<16x32xf32> to vector<16x16xf32>
    %cst_11 = arith.constant 2.000000e+01 : f32
    %31 = vector.broadcast %cst_11 : f32 to vector<16x16xf32>
    %32 = arith.mulf %29, %31 : vector<16x16xf32>
    %33 = math.exp %32 : vector<16x16xf32>
    %34 = math.absf %33 : vector<16x16xf32>
    %cst_12 = arith.constant dense<0.000000e+00> : vector<16xf32>
    %35 = vector.multi_reduction <add>, %34, %cst_12 [0] : vector<16x16xf32> to vector<16xf32>
    %36 = vector.shape_cast %35 : vector<16xf32> to vector<1x16xf32>
    %cst_13 = arith.constant 9.99999996E-13 : f32
    %37 = vector.broadcast %cst_13 : f32 to vector<1x16xf32>
    %38 = arith.maximumf %36, %37 : vector<1x16xf32>
    %39 = vector.broadcast %38 : vector<1x16xf32> to vector<16x16xf32>
    %40 = arith.divf %33, %39 : vector<16x16xf32>
    %41 = math.absf %40 : vector<16x16xf32>
    %cst_14 = arith.constant dense<0.000000e+00> : vector<16xf32>
    %42 = vector.multi_reduction <add>, %41, %cst_14 [1] : vector<16x16xf32> to vector<16xf32>
    %43 = vector.shape_cast %42 : vector<16xf32> to vector<16x1xf32>
    %cst_15 = arith.constant 9.99999996E-13 : f32
    %44 = vector.broadcast %cst_15 : f32 to vector<16x1xf32>
    %45 = arith.maximumf %43, %44 : vector<16x1xf32>
    %46 = vector.broadcast %45 : vector<16x1xf32> to vector<16x16xf32>
    %47 = arith.divf %40, %46 : vector<16x16xf32>
    %48 = math.absf %47 : vector<16x16xf32>
    %cst_16 = arith.constant dense<0.000000e+00> : vector<16xf32>
    %49 = vector.multi_reduction <add>, %48, %cst_16 [0] : vector<16x16xf32> to vector<16xf32>
    %50 = vector.shape_cast %49 : vector<16xf32> to vector<1x16xf32>
    %cst_17 = arith.constant 9.99999996E-13 : f32
    %51 = vector.broadcast %cst_17 : f32 to vector<1x16xf32>
    %52 = arith.maximumf %50, %51 : vector<1x16xf32>
    %53 = vector.broadcast %52 : vector<1x16xf32> to vector<16x16xf32>
    %54 = arith.divf %47, %53 : vector<16x16xf32>
    %55 = math.absf %54 : vector<16x16xf32>
    %cst_18 = arith.constant dense<0.000000e+00> : vector<16xf32>
    %56 = vector.multi_reduction <add>, %55, %cst_18 [1] : vector<16x16xf32> to vector<16xf32>
    %57 = vector.shape_cast %56 : vector<16xf32> to vector<16x1xf32>
    %cst_19 = arith.constant 9.99999996E-13 : f32
    %58 = vector.broadcast %cst_19 : f32 to vector<16x1xf32>
    %59 = arith.maximumf %57, %58 : vector<16x1xf32>
    %60 = vector.broadcast %59 : vector<16x1xf32> to vector<16x16xf32>
    %61 = arith.divf %54, %60 : vector<16x16xf32>
    %62 = math.absf %61 : vector<16x16xf32>
    %cst_20 = arith.constant dense<0.000000e+00> : vector<16xf32>
    %63 = vector.multi_reduction <add>, %62, %cst_20 [0] : vector<16x16xf32> to vector<16xf32>
    %64 = vector.shape_cast %63 : vector<16xf32> to vector<1x16xf32>
    %cst_21 = arith.constant 9.99999996E-13 : f32
    %65 = vector.broadcast %cst_21 : f32 to vector<1x16xf32>
    %66 = arith.maximumf %64, %65 : vector<1x16xf32>
    %67 = vector.broadcast %66 : vector<1x16xf32> to vector<16x16xf32>
    %68 = arith.divf %61, %67 : vector<16x16xf32>
    %69 = math.absf %68 : vector<16x16xf32>
    %cst_22 = arith.constant dense<0.000000e+00> : vector<16xf32>
    %70 = vector.multi_reduction <add>, %69, %cst_22 [1] : vector<16x16xf32> to vector<16xf32>
    %71 = vector.shape_cast %70 : vector<16xf32> to vector<16x1xf32>
    %cst_23 = arith.constant 9.99999996E-13 : f32
    %72 = vector.broadcast %cst_23 : f32 to vector<16x1xf32>
    %73 = arith.maximumf %71, %72 : vector<16x1xf32>
    %74 = vector.broadcast %73 : vector<16x1xf32> to vector<16x16xf32>
    %75 = arith.divf %68, %74 : vector<16x16xf32>
    %76 = arith.mulf %26, %75 : vector<16x16xf32>
    %77 = tpu.iota {dimensions = array<i32: 1>} : vector<16x16xi32>
    %78 = tpu.bitcast %76 : vector<16x16xf32> -> vector<16x16xi32>
    %c-16_i32 = arith.constant -16 : i32
    %79 = vector.broadcast %c-16_i32 : i32 to vector<16x16xi32>
    %80 = arith.andi %78, %79 : vector<16x16xi32>
    %c15_i32 = arith.constant 15 : i32
    %81 = vector.broadcast %c15_i32 : i32 to vector<16x16xi32>
    %82 = arith.subi %81, %77 : vector<16x16xi32>
    %83 = arith.ori %80, %82 : vector<16x16xi32>
    %cst_24 = arith.constant 0.000000e+00 : f32
    %84 = vector.broadcast %cst_24 : f32 to vector<16x16xf32>
    %85 = arith.cmpf ogt, %26, %84 : vector<16x16xf32>
    %c2147483647_i32 = arith.constant 2147483647 : i32
    %86 = vector.broadcast %c2147483647_i32 : i32 to vector<16x16xi32>
    %87 = arith.select %85, %83, %86 : vector<16x16xi1>, vector<16x16xi32>
    %cst_25 = arith.constant 0.000000e+00 : f32
    %88 = vector.broadcast %cst_25 : f32 to vector<16x16xf32>
    %cst_26 = arith.constant dense<2147483647> : vector<16xi32>
    %89 = vector.multi_reduction <minsi>, %87, %cst_26 [1] : vector<16x16xi32> to vector<16xi32>
    %90 = vector.shape_cast %89 : vector<16xi32> to vector<16x1xi32>
    %91 = vector.broadcast %90 : vector<16x1xi32> to vector<16x16xi32>
    %92 = arith.cmpi eq, %87, %91 : vector<16x16xi32>
    %cst_27 = arith.constant 1.000000e+00 : f32
    %93 = vector.broadcast %cst_27 : f32 to vector<16x16xf32>
    %94 = arith.select %92, %93, %88 : vector<16x16xi1>, vector<16x16xf32>
    %c2147483647_i32_28 = arith.constant 2147483647 : i32
    %95 = vector.broadcast %c2147483647_i32_28 : i32 to vector<16x16xi32>
    %96 = arith.select %92, %95, %87 : vector<16x16xi1>, vector<16x16xi32>
    %cst_29 = arith.constant dense<2147483647> : vector<16xi32>
    %97 = vector.multi_reduction <minsi>, %96, %cst_29 [1] : vector<16x16xi32> to vector<16xi32>
    %98 = vector.shape_cast %97 : vector<16xi32> to vector<16x1xi32>
    %99 = vector.broadcast %98 : vector<16x1xi32> to vector<16x16xi32>
    %100 = arith.cmpi eq, %96, %99 : vector<16x16xi32>
    %cst_30 = arith.constant 1.000000e+00 : f32
    %101 = vector.broadcast %cst_30 : f32 to vector<16x16xf32>
    %102 = arith.select %100, %101, %94 : vector<16x16xi1>, vector<16x16xf32>
    %c2147483647_i32_31 = arith.constant 2147483647 : i32
    %103 = vector.broadcast %c2147483647_i32_31 : i32 to vector<16x16xi32>
    %104 = arith.select %100, %103, %96 : vector<16x16xi1>, vector<16x16xi32>
    %cst_32 = arith.constant dense<2147483647> : vector<16xi32>
    %105 = vector.multi_reduction <minsi>, %104, %cst_32 [1] : vector<16x16xi32> to vector<16xi32>
    %106 = vector.shape_cast %105 : vector<16xi32> to vector<16x1xi32>
    %107 = vector.broadcast %106 : vector<16x1xi32> to vector<16x16xi32>
    %108 = arith.cmpi eq, %104, %107 : vector<16x16xi32>
    %cst_33 = arith.constant 1.000000e+00 : f32
    %109 = vector.broadcast %cst_33 : f32 to vector<16x16xf32>
    %110 = arith.select %108, %109, %102 : vector<16x16xi1>, vector<16x16xf32>
    %111 = arith.subf %26, %110 : vector<16x16xf32>
    %112 = arith.mulf %111, %76 : vector<16x16xf32>
    %113 = math.absf %112 : vector<16x16xf32>
    %cst_34 = arith.constant dense<0.000000e+00> : vector<16xf32>
    %114 = vector.multi_reduction <add>, %113, %cst_34 [1] : vector<16x16xf32> to vector<16xf32>
    %115 = vector.shape_cast %114 : vector<16xf32> to vector<16x1xf32>
    %cst_35 = arith.constant 9.99999996E-13 : f32
    %116 = vector.broadcast %cst_35 : f32 to vector<16x1xf32>
    %117 = arith.maximumf %115, %116 : vector<16x1xf32>
    %118 = vector.broadcast %117 : vector<16x1xf32> to vector<16x16xf32>
    %119 = arith.divf %112, %118 : vector<16x16xf32>
    %120 = math.absf %119 : vector<16x16xf32>
    %cst_36 = arith.constant dense<0.000000e+00> : vector<16xf32>
    %121 = vector.multi_reduction <add>, %120, %cst_36 [0] : vector<16x16xf32> to vector<16xf32>
    %122 = vector.shape_cast %121 : vector<16xf32> to vector<1x16xf32>
    %cst_37 = arith.constant 9.99999996E-13 : f32
    %123 = vector.broadcast %cst_37 : f32 to vector<1x16xf32>
    %124 = arith.maximumf %122, %123 : vector<1x16xf32>
    %125 = vector.broadcast %124 : vector<1x16xf32> to vector<16x16xf32>
    %126 = arith.divf %119, %125 : vector<16x16xf32>
    %cst_38 = arith.constant dense<0.000000e+00> : vector<16x128xf32>
    %127 = tpu.matmul %126, %0, %cst_38 {dimension_numbers = #tpu.dot_dimension_numbers<[0], [0], [1], [1], [0, 1, 1, 1], [], []>} : vector<16x16xf32>, vector<16x128xf32>, vector<16x128xf32> -> vector<16x128xf32>
    %128 = tpu.iota {dimensions = array<i32: 0>} : vector<2x16xi32>
    %cst_39 = arith.constant 0.000000e+00 : f32
    %129 = vector.broadcast %cst_39 : f32 to vector<2x16xf32>
    %cst_40 = arith.constant 0.000000e+00 : f32
    %130 = vector.broadcast %cst_40 : f32 to vector<16x1xf32>
    %131 = arith.cmpf oeq, %13, %130 : vector<16x1xf32>
    %132 = arith.extui %131 : vector<16x1xi1> to vector<16x1xi32>
    %133 = arith.sitofp %132 : vector<16x1xi32> to vector<16x1xf32>
    %134 = vector.broadcast %133 : vector<16x1xf32> to vector<16x16xf32>
    %135 = arith.mulf %126, %134 : vector<16x16xf32>
    %cst_41 = arith.constant dense<0.000000e+00> : vector<16xf32>
    %136 = vector.multi_reduction <add>, %135, %cst_41 [0] : vector<16x16xf32> to vector<16xf32>
    %137 = vector.shape_cast %136 : vector<16xf32> to vector<1x16xf32>
    %c0_i32 = arith.constant 0 : i32
    %138 = vector.broadcast %c0_i32 : i32 to vector<2x16xi32>
    %139 = arith.cmpi eq, %128, %138 : vector<2x16xi32>
    %140 = vector.shape_cast %137 : vector<1x16xf32> to vector<1x16xf32>
    %141 = vector.broadcast %140 : vector<1x16xf32> to vector<2x16xf32>
    %142 = arith.select %139, %141, %129 : vector<2x16xi1>, vector<2x16xf32>
    %cst_42 = arith.constant 1.000000e+00 : f32
    %143 = vector.broadcast %cst_42 : f32 to vector<16x1xf32>
    %144 = arith.cmpf oeq, %13, %143 : vector<16x1xf32>
    %145 = arith.extui %144 : vector<16x1xi1> to vector<16x1xi32>
    %146 = arith.sitofp %145 : vector<16x1xi32> to vector<16x1xf32>
    %147 = vector.broadcast %146 : vector<16x1xf32> to vector<16x16xf32>
    %148 = arith.mulf %126, %147 : vector<16x16xf32>
    %cst_43 = arith.constant dense<0.000000e+00> : vector<16xf32>
    %149 = vector.multi_reduction <add>, %148, %cst_43 [0] : vector<16x16xf32> to vector<16xf32>
    %150 = vector.shape_cast %149 : vector<16xf32> to vector<1x16xf32>
    %c1_i32 = arith.constant 1 : i32
    %151 = vector.broadcast %c1_i32 : i32 to vector<2x16xi32>
    %152 = arith.cmpi eq, %128, %151 : vector<2x16xi32>
    %153 = vector.shape_cast %150 : vector<1x16xf32> to vector<1x16xf32>
    %154 = vector.broadcast %153 : vector<1x16xf32> to vector<2x16xf32>
    %155 = arith.select %152, %154, %142 : vector<2x16xi1>, vector<2x16xf32>
    %156 = arith.addf %2, %155 : vector<2x16xf32>
    %cst_44 = arith.constant 9.900000e-01 : f32
    %157 = vector.broadcast %cst_44 : f32 to vector<16x128xf32>
    %158 = arith.mulf %157, %1 : vector<16x128xf32>
    %cst_45 = arith.constant 0.00999999977 : f32
    %159 = vector.broadcast %cst_45 : f32 to vector<16x128xf32>
    %160 = arith.mulf %159, %127 : vector<16x128xf32>
    %161 = arith.addf %158, %160 : vector<16x128xf32>
    %162 = arith.mulf %161, %161 : vector<16x128xf32>
    %cst_46 = arith.constant dense<0.000000e+00> : vector<16xf32>
    %163 = vector.multi_reduction <add>, %162, %cst_46 [1] : vector<16x128xf32> to vector<16xf32>
    %164 = vector.shape_cast %163 : vector<16xf32> to vector<16x1xf32>
    %cst_47 = arith.constant 1.000000e-24 : f32
    %165 = vector.broadcast %cst_47 : f32 to vector<16x1xf32>
    %166 = arith.maximumf %164, %165 : vector<16x1xf32>
    %167 = math.rsqrt %166 : vector<16x1xf32>
    %168 = vector.broadcast %167 : vector<16x1xf32> to vector<16x128xf32>
    %169 = arith.mulf %161, %168 : vector<16x128xf32>
    %cst_48 = arith.constant dense<0.000000e+00> : vector<16x16xf32>
    %170 = tpu.matmul %0, %169, %cst_48 {dimension_numbers = #tpu.dot_dimension_numbers<[1], [1], [0], [0], [0, 0, 1, 0], [], []>} : vector<16x128xf32>, vector<16x128xf32>, vector<16x16xf32> -> vector<16x16xf32>
    %cst_49 = arith.constant 2.000000e+01 : f32
    %171 = vector.broadcast %cst_49 : f32 to vector<16x16xf32>
    %172 = arith.mulf %170, %171 : vector<16x16xf32>
    %173 = math.exp %172 : vector<16x16xf32>
    %174 = math.absf %173 : vector<16x16xf32>
    %cst_50 = arith.constant dense<0.000000e+00> : vector<16xf32>
    %175 = vector.multi_reduction <add>, %174, %cst_50 [0] : vector<16x16xf32> to vector<16xf32>
    %176 = vector.shape_cast %175 : vector<16xf32> to vector<1x16xf32>
    %cst_51 = arith.constant 9.99999996E-13 : f32
    %177 = vector.broadcast %cst_51 : f32 to vector<1x16xf32>
    %178 = arith.maximumf %176, %177 : vector<1x16xf32>
    %179 = vector.broadcast %178 : vector<1x16xf32> to vector<16x16xf32>
    %180 = arith.divf %173, %179 : vector<16x16xf32>
    %181 = math.absf %180 : vector<16x16xf32>
    %cst_52 = arith.constant dense<0.000000e+00> : vector<16xf32>
    %182 = vector.multi_reduction <add>, %181, %cst_52 [1] : vector<16x16xf32> to vector<16xf32>
    %183 = vector.shape_cast %182 : vector<16xf32> to vector<16x1xf32>
    %cst_53 = arith.constant 9.99999996E-13 : f32
    %184 = vector.broadcast %cst_53 : f32 to vector<16x1xf32>
    %185 = arith.maximumf %183, %184 : vector<16x1xf32>
    %186 = vector.broadcast %185 : vector<16x1xf32> to vector<16x16xf32>
    %187 = arith.divf %180, %186 : vector<16x16xf32>
    %188 = math.absf %187 : vector<16x16xf32>
    %cst_54 = arith.constant dense<0.000000e+00> : vector<16xf32>
    %189 = vector.multi_reduction <add>, %188, %cst_54 [0] : vector<16x16xf32> to vector<16xf32>
    %190 = vector.shape_cast %189 : vector<16xf32> to vector<1x16xf32>
    %cst_55 = arith.constant 9.99999996E-13 : f32
    %191 = vector.broadcast %cst_55 : f32 to vector<1x16xf32>
    %192 = arith.maximumf %190, %191 : vector<1x16xf32>
    %193 = vector.broadcast %192 : vector<1x16xf32> to vector<16x16xf32>
    %194 = arith.divf %187, %193 : vector<16x16xf32>
    %195 = math.absf %194 : vector<16x16xf32>
    %cst_56 = arith.constant dense<0.000000e+00> : vector<16xf32>
    %196 = vector.multi_reduction <add>, %195, %cst_56 [1] : vector<16x16xf32> to vector<16xf32>
    %197 = vector.shape_cast %196 : vector<16xf32> to vector<16x1xf32>
    %cst_57 = arith.constant 9.99999996E-13 : f32
    %198 = vector.broadcast %cst_57 : f32 to vector<16x1xf32>
    %199 = arith.maximumf %197, %198 : vector<16x1xf32>
    %200 = vector.broadcast %199 : vector<16x1xf32> to vector<16x16xf32>
    %201 = arith.divf %194, %200 : vector<16x16xf32>
    %202 = math.absf %201 : vector<16x16xf32>
    %cst_58 = arith.constant dense<0.000000e+00> : vector<16xf32>
    %203 = vector.multi_reduction <add>, %202, %cst_58 [0] : vector<16x16xf32> to vector<16xf32>
    %204 = vector.shape_cast %203 : vector<16xf32> to vector<1x16xf32>
    %cst_59 = arith.constant 9.99999996E-13 : f32
    %205 = vector.broadcast %cst_59 : f32 to vector<1x16xf32>
    %206 = arith.maximumf %204, %205 : vector<1x16xf32>
    %207 = vector.broadcast %206 : vector<1x16xf32> to vector<16x16xf32>
    %208 = arith.divf %201, %207 : vector<16x16xf32>
    %209 = math.absf %208 : vector<16x16xf32>
    %cst_60 = arith.constant dense<0.000000e+00> : vector<16xf32>
    %210 = vector.multi_reduction <add>, %209, %cst_60 [1] : vector<16x16xf32> to vector<16xf32>
    %211 = vector.shape_cast %210 : vector<16xf32> to vector<16x1xf32>
    %cst_61 = arith.constant 9.99999996E-13 : f32
    %212 = vector.broadcast %cst_61 : f32 to vector<16x1xf32>
    %213 = arith.maximumf %211, %212 : vector<16x1xf32>
    %214 = vector.broadcast %213 : vector<16x1xf32> to vector<16x16xf32>
    %215 = arith.divf %208, %214 : vector<16x16xf32>
    %cst_62 = arith.constant 1.000000e+01 : f32
    %216 = vector.broadcast %cst_62 : f32 to vector<16x16xf32>
    %217 = arith.mulf %170, %216 : vector<16x16xf32>
    %218 = arith.mulf %26, %215 : vector<16x16xf32>
    %219 = arith.mulf %111, %218 : vector<16x16xf32>
    %220 = math.absf %219 : vector<16x16xf32>
    %cst_63 = arith.constant dense<0.000000e+00> : vector<16xf32>
    %221 = vector.multi_reduction <add>, %220, %cst_63 [1] : vector<16x16xf32> to vector<16xf32>
    %222 = vector.shape_cast %221 : vector<16xf32> to vector<16x1xf32>
    %cst_64 = arith.constant 9.99999996E-13 : f32
    %223 = vector.broadcast %cst_64 : f32 to vector<16x1xf32>
    %224 = arith.maximumf %222, %223 : vector<16x1xf32>
    %225 = vector.broadcast %224 : vector<16x1xf32> to vector<16x16xf32>
    %226 = arith.divf %219, %225 : vector<16x16xf32>
    %227 = arith.mulf %226, %217 : vector<16x16xf32>
    %cst_65 = arith.constant dense<0.000000e+00> : vector<16xf32>
    %228 = vector.multi_reduction <add>, %227, %cst_65 [1] : vector<16x16xf32> to vector<16xf32>
    %229 = vector.shape_cast %228 : vector<16xf32> to vector<16x1xf32>
    %cst_66 = arith.constant dense<0xFF800000> : vector<16xf32>
    %230 = vector.multi_reduction <maximumf>, %217, %cst_66 [1] : vector<16x16xf32> to vector<16xf32>
    %231 = vector.shape_cast %230 : vector<16xf32> to vector<16x1xf32>
    %232 = vector.broadcast %231 : vector<16x1xf32> to vector<16x16xf32>
    %233 = arith.subf %217, %232 : vector<16x16xf32>
    %234 = math.exp %233 : vector<16x16xf32>
    %cst_67 = arith.constant dense<0.000000e+00> : vector<16xf32>
    %235 = vector.multi_reduction <add>, %234, %cst_67 [1] : vector<16x16xf32> to vector<16xf32>
    %236 = vector.shape_cast %235 : vector<16xf32> to vector<16x1xf32>
    %237 = math.log %236 : vector<16x1xf32>
    %238 = arith.addf %231, %237 : vector<16x1xf32>
    %239 = vector.shape_cast %238 : vector<16x1xf32> to vector<1x16x1xf32>
    %cst_68 = arith.constant dense<0.000000e+00> : vector<1xf32>
    %240 = vector.multi_reduction <add>, %239, %cst_68 [1, 2] : vector<1x16x1xf32> to vector<1xf32>
    %241 = vector.shape_cast %240 : vector<1xf32> to vector<1x1x1xf32>
    %242 = vector.extract %241[0, 0, 0] : f32 from vector<1x1x1xf32>
    %cst_69 = arith.constant 1.600000e+01 : f32
    %243 = arith.divf %242, %cst_69 : f32
    %244 = vector.shape_cast %229 : vector<16x1xf32> to vector<1x16x1xf32>
    %cst_70 = arith.constant dense<0.000000e+00> : vector<1xf32>
    %245 = vector.multi_reduction <add>, %244, %cst_70 [1, 2] : vector<1x16x1xf32> to vector<1xf32>
    %246 = vector.shape_cast %245 : vector<1xf32> to vector<1x1x1xf32>
    %247 = vector.extract %246[0, 0, 0] : f32 from vector<1x1x1xf32>
    %cst_71 = arith.constant 1.600000e+01 : f32
    %248 = arith.divf %247, %cst_71 : f32
    %249 = arith.subf %243, %248 : f32
    %cst_72 = arith.constant 0.000000e+00 : f32
    %250 = vector.broadcast %cst_72 : f32 to vector<16x16xf32>
    %251 = arith.select %7, %30, %250 : vector<16x16xi1>, vector<16x16xf32>
    %cst_73 = arith.constant dense<0.000000e+00> : vector<16xf32>
    %252 = vector.multi_reduction <add>, %251, %cst_73 [1] : vector<16x16xf32> to vector<16xf32>
    %253 = vector.shape_cast %252 : vector<16xf32> to vector<16x1xf32>
    %cst_74 = arith.constant dense<0.000000e+00> : vector<16xf32>
    %254 = vector.multi_reduction <add>, %251, %cst_74 [0] : vector<16x16xf32> to vector<16xf32>
    %255 = vector.shape_cast %254 : vector<16xf32> to vector<1x16xf32>
    %cst_75 = arith.constant 1.000000e-24 : f32
    %256 = vector.broadcast %cst_75 : f32 to vector<16x1xf32>
    %257 = arith.maximumf %253, %256 : vector<16x1xf32>
    %258 = math.rsqrt %257 : vector<16x1xf32>
    %cst_76 = arith.constant 1.000000e-24 : f32
    %259 = vector.broadcast %cst_76 : f32 to vector<1x16xf32>
    %260 = arith.maximumf %255, %259 : vector<1x16xf32>
    %261 = math.rsqrt %260 : vector<1x16xf32>
    %262 = vector.broadcast %258 : vector<16x1xf32> to vector<16x16xf32>
    %263 = vector.broadcast %261 : vector<1x16xf32> to vector<16x16xf32>
    %264 = arith.mulf %262, %263 : vector<16x16xf32>
    %265 = arith.mulf %30, %264 : vector<16x16xf32>
    %cst_77 = arith.constant 2.000000e+00 : f32
    %266 = vector.broadcast %cst_77 : f32 to vector<16x16xf32>
    %267 = arith.mulf %265, %266 : vector<16x16xf32>
    %cst_78 = arith.constant dense<0xFF800000> : vector<16xf32>
    %268 = vector.multi_reduction <maximumf>, %267, %cst_78 [1] : vector<16x16xf32> to vector<16xf32>
    %269 = vector.shape_cast %268 : vector<16xf32> to vector<16x1xf32>
    %270 = vector.broadcast %269 : vector<16x1xf32> to vector<16x16xf32>
    %271 = arith.subf %267, %270 : vector<16x16xf32>
    %cst_79 = arith.constant 0.000000e+00 : f32
    %cst_80 = arith.constant 1.000000e+00 : f32
    %272 = vector.broadcast %cst_79 : f32 to vector<16x16xf32>
    %273 = vector.broadcast %cst_80 : f32 to vector<16x16xf32>
    %274 = arith.select %7, %272, %273 : vector<16x16xi1>, vector<16x16xf32>
    %275 = vector.broadcast %13 : vector<16x1xf32> to vector<16x16xf32>
    %276 = vector.broadcast %4 : vector<1x16xf32> to vector<16x16xf32>
    %277 = arith.cmpf oeq, %275, %276 : vector<16x16xf32>
    %278 = arith.extui %277 : vector<16x16xi1> to vector<16x16xi32>
    %279 = arith.sitofp %278 : vector<16x16xi32> to vector<16x16xf32>
    %280 = arith.mulf %279, %274 : vector<16x16xf32>
    %281 = math.exp %271 : vector<16x16xf32>
    %282 = arith.mulf %281, %274 : vector<16x16xf32>
    %cst_81 = arith.constant dense<0.000000e+00> : vector<16xf32>
    %283 = vector.multi_reduction <add>, %282, %cst_81 [1] : vector<16x16xf32> to vector<16xf32>
    %284 = vector.shape_cast %283 : vector<16xf32> to vector<16x1xf32>
    %cst_82 = arith.constant 9.99999997E-7 : f32
    %285 = vector.broadcast %cst_82 : f32 to vector<16x1xf32>
    %286 = arith.addf %284, %285 : vector<16x1xf32>
    %287 = math.log %286 : vector<16x1xf32>
    %cst_83 = arith.constant dense<0.000000e+00> : vector<16xf32>
    %288 = vector.multi_reduction <add>, %280, %cst_83 [1] : vector<16x16xf32> to vector<16xf32>
    %289 = vector.shape_cast %288 : vector<16xf32> to vector<16x1xf32>
    %cst_84 = arith.constant 9.99999997E-7 : f32
    %290 = vector.broadcast %cst_84 : f32 to vector<16x1xf32>
    %291 = arith.maximumf %289, %290 : vector<16x1xf32>
    %292 = arith.mulf %280, %271 : vector<16x16xf32>
    %cst_85 = arith.constant dense<0.000000e+00> : vector<16xf32>
    %293 = vector.multi_reduction <add>, %292, %cst_85 [1] : vector<16x16xf32> to vector<16xf32>
    %294 = vector.shape_cast %293 : vector<16xf32> to vector<16x1xf32>
    %295 = arith.divf %294, %291 : vector<16x1xf32>
    %296 = arith.subf %295, %287 : vector<16x1xf32>
    %297 = vector.shape_cast %296 : vector<16x1xf32> to vector<1x16x1xf32>
    %cst_86 = arith.constant dense<0.000000e+00> : vector<1xf32>
    %298 = vector.multi_reduction <add>, %297, %cst_86 [1, 2] : vector<1x16x1xf32> to vector<1xf32>
    %299 = vector.shape_cast %298 : vector<1xf32> to vector<1x1x1xf32>
    %300 = vector.extract %299[0, 0, 0] : f32 from vector<1x1x1xf32>
    %cst_87 = arith.constant 1.600000e+01 : f32
    %301 = arith.divf %300, %cst_87 : f32
    %cst_88 = arith.constant 0.000000e+00 : f32
    %302 = arith.subf %cst_88, %301 : f32
    %cst_89 = arith.constant 1.000000e+00 : f32
    %303 = arith.mulf %cst_89, %302 : f32
    %304 = arith.addf %249, %303 : f32
    %c0_90 = arith.constant 0 : index
    %c0_91 = arith.constant 0 : index
    %305 = vector.load %arg5[%c0_90, %c0_91] : memref<16x128xf32, #tpu.memory_space<vmem>>, vector<16x128xf32>
    tpu.vector_store %arg5[%c0_90, %c0_91], %169 {strides = array<i32>} : memref<16x128xf32, #tpu.memory_space<vmem>>, vector<16x128xf32>,
    %c0_92 = arith.constant 0 : index
    %c0_93 = arith.constant 0 : index
    %306 = vector.load %arg6[%c0_92, %c0_93] : memref<2x16xf32, #tpu.memory_space<vmem>>, vector<2x16xf32>
    tpu.vector_store %arg6[%c0_92, %c0_93], %156 {strides = array<i32>} : memref<2x16xf32, #tpu.memory_space<vmem>>, vector<2x16xf32>,
    %307 = tpu.iota {dimensions = array<i32: 1>} : vector<1x128xi32>
    %c0_i32_94 = arith.constant 0 : i32
    %308 = vector.broadcast %c0_i32_94 : i32 to vector<1x128xi32>
    %309 = arith.cmpi eq, %307, %308 : vector<1x128xi32>
    %c1_i32_95 = arith.constant 1 : i32
    %310 = vector.broadcast %c1_i32_95 : i32 to vector<1x128xi32>
    %311 = arith.cmpi eq, %307, %310 : vector<1x128xi32>
    %c2_i32 = arith.constant 2 : i32
    %312 = vector.broadcast %c2_i32 : i32 to vector<1x128xi32>
    %313 = arith.cmpi eq, %307, %312 : vector<1x128xi32>
    %cst_96 = arith.constant 0.000000e+00 : f32
    %314 = vector.broadcast %303 : f32 to vector<1x128xf32>
    %315 = vector.broadcast %cst_96 : f32 to vector<1x128xf32>
    %316 = arith.select %313, %314, %315 : vector<1x128xi1>, vector<1x128xf32>
    %317 = vector.broadcast %249 : f32 to vector<1x128xf32>
    %318 = arith.select %311, %317, %316 : vector<1x128xi1>, vector<1x128xf32>
    %319 = vector.broadcast %304 : f32 to vector<1x128xf32>
    %320 = arith.select %309, %319, %318 : vector<1x128xi1>, vector<1x128xf32>
    %c0_97 = arith.constant 0 : index
    %c0_98 = arith.constant 0 : index
    %321 = vector.load %arg4[%c0_97, %c0_98] : memref<1x128xf32, #tpu.memory_space<vmem>>, vector<1x128xf32>
    tpu.vector_store %arg4[%c0_97, %c0_98], %320 {strides = array<i32>} : memref<1x128xf32, #tpu.memory_space<vmem>>, vector<1x128xf32>,
    return
  }
}

</mosaic_0001>

<llo_original>
// kernel: _palm_forward_jit.1
$region0: #{_palm_forward_jit.1}
  #allocation0 [shape = 'u32[]', space=smem, size = 0x4, offset = 0x4, fixed_abs, tag = 'smem constant byte address 0x4 - core index']
  #allocation1 [shape = 'u32[144,128]{1,0:T(1,128)}', space=vmem, size = 0x12000, scoped, tag = 'internal scratch']
  %s0 = inlined_call_operand.vmem [shape: f32[16,128], index: 0, kind: input, shape index: {}]
  %s1 = inlined_call_operand.vmem [shape: f32[16,128], index: 1, kind: input, shape index: {}, may-alias: {1,5}]
  %s2 = inlined_call_operand.vmem [shape: f32[2,16], index: 2, kind: input, shape index: {}, may-alias: {2,6}]
  %s3 = inlined_call_operand.vmem [shape: s32[1,16], index: 3, kind: input, shape index: {}]
  %s4 = inlined_call_operand.vmem [shape: f32[1,128], index: 4, kind: output, shape index: {0}]
  %s5 = inlined_call_operand.vmem [shape: f32[16,128], index: 5, kind: output, shape index: {1}, may-alias: {1,5}]
  %s6 = inlined_call_operand.vmem [shape: f32[2,16], index: 6, kind: output, shape index: {2}, may-alias: {2,6}]
  %7 = xla_tuple %s4, %s5, %s6
  %s8 = sld [smem:[#allocation0]]
  $region42: #{_palm_forward_jit.1} parent=0
    _
  %s10 = ssub.s32 1, %s8
  %s11 = scalar_select 0, %s10, %s8
  // Predicated region
  $region2: #{_palm_forward_jit.1} parent=0 // pred_check
    _
  $region3: #{_palm_forward_jit.1} parent=0 // pred_check_branch
    %13 = sbr.rel (0) target = $region5
  $region4: #{_palm_forward_jit.1} parent=0 // pred_region
    _
  $region5: #{_palm_forward_jit.1} parent=0 // pred_fallthru
    _
  // Predicated region
  $region6: #{_palm_forward_jit.1} parent=0 // pred_check
    _
  $region7: #{_palm_forward_jit.1} parent=0 // pred_check_branch
    %15 = sbr.rel (0) target = $region9
  $region8: #{_palm_forward_jit.1} parent=0 // pred_region
    _
  $region9: #{_palm_forward_jit.1} parent=0 // pred_fallthru
    _
  // Predicated region
  $region10: #{_palm_forward_jit.1} parent=0 // pred_check
    _
  $region11: #{_palm_forward_jit.1} parent=0 // pred_check_branch
    %17 = sbr.rel (0) target = $region13
  $region12: #{_palm_forward_jit.1} parent=0 // pred_region
    _
  $region13: #{_palm_forward_jit.1} parent=0 // pred_fallthru
    _
  // Predicated region
  $region14: #{_palm_forward_jit.1} parent=0 // pred_check
    _
  $region15: #{_palm_forward_jit.1} parent=0 // pred_check_branch
    %19 = sbr.rel (0) target = $region17
  $region16: #{_palm_forward_jit.1} parent=0 // pred_region
    _
  $region17: #{_palm_forward_jit.1} parent=0 // pred_fallthru
    _
  %v20 = vld [vmem:[%s0] sm:$0xff]
  %v21 = vld [vmem:[%s0 + $0x8] sm:$0xff]
  %v22 = vld [vmem:[%s1] sm:$0xff]
  %v23 = vld [vmem:[%s1 + $0x8] sm:$0xff]
  %v24 = vld [vmem:[%s2] sm:$0x3]
  %v25 = vld [vmem:[%s3] sm:$0x1]
  %v26 = vcvt.s32.f32 %v25
  %v27 = vlaneseq
  %v28 = vshrl.u32 %v27, 7
  %v29 = vadd.s32 %v28, 8
  %v30 = vlaneseq
  %v31 = vand.u32 %v30, 127
  %vm32 = vcmp.eq.s32.totalorder %v28, %v31
  %vm33 = vcmp.eq.s32.totalorder %v29, %v31
  %v35 = vlaneseq
  %v36 = vshrl.u32 %v35, 7
  %v37 = vsub.s32 0, %v36
  %v38 = vrot.slane %v26, %v37
  %v40 = vsel %vm32, %v38, 0.0
  %v41 = vsel %vm33, %v38, 0.0
  %vm42 = vcmask 130048
  %v43 = vsel %vm42, %v40, 0.0
  %44 = vadd.xlane.f32.xlu0 %v43
  %v45 = vpop.xlane.xlu0 %44
  %v46 = vsel %vm42, %v41, 0.0
  %47 = vadd.xlane.f32.xlu0 %v46
  %v48 = vpop.xlane.xlu0 %47
  %v49 = vcvt.s32.f32 %v31
  %v50 = vrcp.pop 2.0
  %v51 = vmul.f32 %v49, %v50
  %v52 = vfloor.f32 %v51
  %v53 = vmul.f32 %v52, 2.0
  %v54 = vsub.f32 %v49, %v53
  %vm55 = vcmp.eq.f32.partialorder %v45, %v54
  %vm56 = vcmp.eq.f32.partialorder %v48, %v54
  %v57 = vsel %vm55, 1, 0
  %v58 = vsel %vm56, 1, 0
  %v59 = vcvt.s32.f32 %v57
  %v60 = vcvt.s32.f32 %v58
  %61 = vmatprep.subr.mxu0 0.0
  %62 = vmatpush1.xpose.msra.mxu0 %v22
  %63 = vmatprep.subr.mxu0 0.0
  %64 = vmatpush1.xpose.msra.mxu0 %v23
  %65 = vmatprep.subr.mxu0 0.0
  %66 = vmatpush1.xpose.msra.mxu0 %v20
  %67 = vmatprep.subr.mxu0 0.0
  %68 = vmatpush1.xpose.msra.mxu0 %v21
  %69 = vmatprep.subr.mxu0 0.0
  %70 = vmatpush1.xpose.msra.mxu0 0.0
  %71 = vmatprep.subr.mxu0 0.0
  %72 = vmatpush1.xpose.msra.mxu0 0.0
  %73 = vmatprep.subr.mxu0 0.0
  %74 = vmatpush1.xpose.msra.mxu0 0.0
  %75 = vmatprep.subr.mxu0 0.0
  %76 = vmatpush1.xpose.msra.mxu0 0.0
  %77 = vmatprep.subr.mxu0 0.0
  %78 = vmatpush1.xpose.msra.mxu0 0.0
  %79 = vmatprep.subr.mxu0 0.0
  %80 = vmatpush1.xpose.msra.mxu0 0.0
  %81 = vmatprep.subr.mxu0 0.0
  %82 = vmatpush1.xpose.msra.mxu0 0.0
  %83 = vmatprep.subr.mxu0 0.0
  %84 = vmatpush1.xpose.msra.mxu0 0.0
  %85 = vmatprep.subr.mxu0 0.0
  %86 = vmatpush1.xpose.msra.mxu0 0.0
  %87 = vmatprep.subr.mxu0 0.0
  %88 = vmatpush1.xpose.msra.mxu0 0.0
  %89 = vmatprep.subr.mxu0 0.0
  %90 = vmatpush1.xpose.msra.mxu0 0.0
  %91 = vmatprep.subr.mxu0 0.0
  %92 = vmatpush1.xpose.msra.mxu0 0.0
  %93 = vmatprep.subr.mxu0 0.0
  %94 = vmatpush1.xpose.msra.mxu0 0.0
  %95 = vmatprep.subr.mxu0 0.0
  %96 = vmatpush1.xpose.msra.mxu0 0.0
  %97 = vmatprep.subr.mxu0 0.0
  %98 = vmatpush1.xpose.msra.mxu0 0.0
  %99 = vmatprep.subr.mxu0 0.0
  %100 = vmatpush1.xpose.msra.mxu0 0.0
  %101 = vmatprep.subr.mxu0 0.0
  %102 = vmatpush1.xpose.msra.mxu0 0.0
  %103 = vmatprep.subr.mxu0 0.0
  %104 = vmatpush1.xpose.msra.mxu0 0.0
  %105 = vmatprep.subr.mxu0 0.0
  %106 = vmatpush1.xpose.msra.mxu0 0.0
  %107 = vmatprep.subr.mxu0 0.0
  %108 = vmatpush1.xpose.msra.mxu0 0.0
  %109 = vmatprep.subr.mxu0 0.0
  %110 = vmatpush1.xpose.msra.mxu0 0.0
  %111 = vmatprep.subr.mxu0 0.0
  %112 = vmatpush1.xpose.msra.mxu0 0.0
  %113 = vmatprep.subr.mxu0 0.0
  %114 = vmatpush1.xpose.msra.mxu0 0.0
  %115 = vmatprep.subr.mxu0 0.0
  %116 = vmatpush1.xpose.msra.mxu0 0.0
  %117 = vmatprep.subr.mxu0 0.0
  %118 = vmatpush1.xpose.msra.mxu0 0.0
  %119 = vmatprep.subr.mxu0 0.0
  %120 = vmatpush1.xpose.msra.mxu0 0.0
  %121 = vmatprep.subr.mxu0 0.0
  %122 = vmatpush1.xpose.msra.mxu0 0.0
  %123 = vmatprep.subr.mxu0 0.0
  %124 = vmatpush1.xpose.msra.mxu0 0.0
  %125 = vmatprep.mubr.f32.mxu0 0.0
  %126 = vmatmul.mubr.f32.gmra.mrb[0].mxu0 %v20
  %v127 = vpop.f32.mrb[0].mxu0
  %v128 = vadd.f32 0.0, %v127
  %v129 = vpop.f32.mrb[0].mxu0
  %130 = vmatprep.mubr.f32.mxu0 0.0
  %131 = vmatmul.mubr.f32.gmra.mrb[0].mxu0 %v21
  %v132 = vpop.f32.mrb[0].mxu0
  %v133 = vadd.f32 0.0, %v132
  %v134 = vpop.f32.mrb[0].mxu0
  %135 = vdwg.mxu0
  %v136 = vmul.f32 %v128, 20.0
  %v137 = vmul.f32 %v133, 20.0
  %v138 = vmul.f32 %v136, 1.442695
  %v139 = vpow.pop %v138
  %v140 = vmul.f32 %v137, 1.442695
  %v141 = vpow.pop %v140
  %v142 = vand.u32 2147483647, %v139
  %v143 = vand.u32 2147483647, %v141
  %v144 = vsel %vm42, %v142, 0.0
  %v145 = vsel %vm42, %v143, 0.0
  %v146 = vadd.f32 %v144, %v145
  %v147 = vrot.slane %v146, 4
  %v148 = vadd.f32 %v146, %v147
  %v149 = vrot.slane %v148, 2
  %v150 = vadd.f32 %v148, %v149
  %v151 = vrot.slane %v150, 1
  %v152 = vadd.f32 %v150, %v151
  %v153 = vmax.f32 %v152, 1e-12
  %v154 = vrcp.pop %v153
  %v155 = vmul.f32 %v139, %v154
  %v156 = vmul.f32 %v141, %v154
  %v157 = vand.u32 2147483647, %v155
  %v158 = vand.u32 2147483647, %v156
  %v159 = vsel %vm42, %v157, 0.0
  %160 = vadd.xlane.f32.xlu0 %v159
  %v161 = vpop.xlane.xlu0 %160
  %v162 = vsel %vm42, %v158, 0.0
  %163 = vadd.xlane.f32.xlu0 %v162
  %v164 = vpop.xlane.xlu0 %163
  %v165 = vmax.f32 %v161, 1e-12
  %v166 = vmax.f32 %v164, 1e-12
  %v167 = vrcp.pop %v165
  %v168 = vmul.f32 %v155, %v167
  %v169 = vrcp.pop %v166
  %v170 = vmul.f32 %v156, %v169
  %v171 = vand.u32 2147483647, %v168
  %v172 = vand.u32 2147483647, %v170
  %v173 = vsel %vm42, %v171, 0.0
  %v174 = vsel %vm42, %v172, 0.0
  %v175 = vadd.f32 %v173, %v174
  %v176 = vrot.slane %v175, 4
  %v177 = vadd.f32 %v175, %v176
  %v178 = vrot.slane %v177, 2
  %v179 = vadd.f32 %v177, %v178
  %v180 = vrot.slane %v179, 1
  %v181 = vadd.f32 %v179, %v180
  %v182 = vmax.f32 %v181, 1e-12
  %v183 = vrcp.pop %v182
  %v184 = vmul.f32 %v168, %v183
  %v185 = vmul.f32 %v170, %v183
  %v186 = vand.u32 2147483647, %v184
  %v187 = vand.u32 2147483647, %v185
  %v188 = vsel %vm42, %v186, 0.0
  %189 = vadd.xlane.f32.xlu0 %v188
  %v190 = vpop.xlane.xlu0 %189
  %v191 = vsel %vm42, %v187, 0.0
  %192 = vadd.xlane.f32.xlu0 %v191
  %v193 = vpop.xlane.xlu0 %192
  %v194 = vmax.f32 %v190, 1e-12
  %v195 = vmax.f32 %v193, 1e-12
  %v196 = vrcp.pop %v194
  %v197 = vmul.f32 %v184, %v196
  %v198 = vrcp.pop %v195
  %v199 = vmul.f32 %v185, %v198
  %v200 = vand.u32 2147483647, %v197
  %v201 = vand.u32 2147483647, %v199
  %v202 = vsel %vm42, %v200, 0.0
  %v203 = vsel %vm42, %v201, 0.0
  %v204 = vadd.f32 %v202, %v203
  %v205 = vrot.slane %v204, 4
  %v206 = vadd.f32 %v204, %v205
  %v207 = vrot.slane %v206, 2
  %v208 = vadd.f32 %v206, %v207
  %v209 = vrot.slane %v208, 1
  %v210 = vadd.f32 %v208, %v209
  %v211 = vmax.f32 %v210, 1e-12
  %v212 = vrcp.pop %v211
  %v213 = vmul.f32 %v197, %v212
  %v214 = vmul.f32 %v199, %v212
  %v215 = vand.u32 2147483647, %v213
  %v216 = vand.u32 2147483647, %v214
  %v217 = vsel %vm42, %v215, 0.0
  %218 = vadd.xlane.f32.xlu0 %v217
  %v219 = vpop.xlane.xlu0 %218
  %v220 = vsel %vm42, %v216, 0.0
  %221 = vadd.xlane.f32.xlu0 %v220
  %v222 = vpop.xlane.xlu0 %221
  %v223 = vmax.f32 %v219, 1e-12
  %v224 = vmax.f32 %v222, 1e-12
  %v225 = vrcp.pop %v223
  %v226 = vmul.f32 %v213, %v225
  %v227 = vrcp.pop %v224
  %v228 = vmul.f32 %v214, %v227
  %v229 = vmul.f32 %v59, %v226
  %v230 = vmul.f32 %v60, %v228
  %v233 = vand.u32 %v229, 4294967280
  %v234 = vand.u32 %v230, 4294967280
  %v235 = vsub.s32 15, %v31
  %v236 = vor.u32 %v233, %v235
  %v237 = vor.u32 %v234, %v235
  %vm238 = vcmp.gt.f32.partialorder %v59, 0.0
  %vm239 = vcmp.gt.f32.partialorder %v60, 0.0
  %v240 = vsel %vm238, %v236, 2147483647
  %v241 = vsel %vm239, %v237, 2147483647
  %v242 = vsel %vm42, %v240, 2147483647
  %v243 = vand.u32 %v242, 65535
  %v244 = vshra.s32 %v242, 16
  %v245 = vcvt.s32.f32 %v243
  %v246 = vcvt.s32.f32 %v244
  %247 = vmin.xlane.f32.xlu0 %v246
  %v248 = vpop.xlane.xlu0 %247
  %vm249 = vcmp.eq.f32.partialorder %v246, %v248
  %v250 = vsel %vm249, %v245, inf
  %251 = vmin.xlane.f32.xlu0 %v250
  %v252 = vpop.xlane.xlu0 %251
  %v253 = vcvt.f32.s32 %v252
  %v254 = vcvt.f32.s32 %v248
  %v255 = vshll.u32 %v254, 16
  %v256 = vadd.s32 %v255, %v253
  %v257 = vsel %vm42, %v241, 2147483647
  %v258 = vand.u32 %v257, 65535
  %v259 = vshra.s32 %v257, 16
  %v260 = vcvt.s32.f32 %v258
  %v261 = vcvt.s32.f32 %v259
  %262 = vmin.xlane.f32.xlu0 %v261
  %v263 = vpop.xlane.xlu0 %262
  %vm264 = vcmp.eq.f32.partialorder %v261, %v263
  %v265 = vsel %vm264, %v260, inf
  %266 = vmin.xlane.f32.xlu0 %v265
  %v267 = vpop.xlane.xlu0 %266
  %v268 = vcvt.f32.s32 %v267
  %v269 = vcvt.f32.s32 %v263
  %v270 = vshll.u32 %v269, 16
  %v271 = vadd.s32 %v270, %v268
  %vm272 = vcmp.eq.s32.totalorder %v240, %v256
  %vm273 = vcmp.eq.s32.totalorder %v241, %v271
  %v274 = vsel %vm272, 1.0, 0.0
  %v275 = vsel %vm273, 1.0, 0.0
  %v276 = vsel %vm272, 2147483647, %v240
  %v277 = vsel %vm273, 2147483647, %v241
  %v278 = vsel %vm42, %v276, 2147483647
  %v279 = vand.u32 %v278, 65535
  %v280 = vshra.s32 %v278, 16
  %v281 = vcvt.s32.f32 %v279
  %v282 = vcvt.s32.f32 %v280
  %283 = vmin.xlane.f32.xlu0 %v282
  %v284 = vpop.xlane.xlu0 %283
  %vm285 = vcmp.eq.f32.partialorder %v282, %v284
  %v286 = vsel %vm285, %v281, inf
  %287 = vmin.xlane.f32.xlu0 %v286
  %v288 = vpop.xlane.xlu0 %287
  %v289 = vcvt.f32.s32 %v288
  %v290 = vcvt.f32.s32 %v284
  %v291 = vshll.u32 %v290, 16
  %v292 = vadd.s32 %v291, %v289
  %v293 = vsel %vm42, %v277, 2147483647
  %v294 = vand.u32 %v293, 65535
  %v295 = vshra.s32 %v293, 16
  %v296 = vcvt.s32.f32 %v294
  %v297 = vcvt.s32.f32 %v295
  %298 = vmin.xlane.f32.xlu0 %v297
  %v299 = vpop.xlane.xlu0 %298
  %vm300 = vcmp.eq.f32.partialorder %v297, %v299
  %v301 = vsel %vm300, %v296, inf
  %302 = vmin.xlane.f32.xlu0 %v301
  %v303 = vpop.xlane.xlu0 %302
  %v304 = vcvt.f32.s32 %v303
  %v305 = vcvt.f32.s32 %v299
  %v306 = vshll.u32 %v305, 16
  %v307 = vadd.s32 %v306, %v304
  %vm308 = vcmp.eq.s32.totalorder %v276, %v292
  %vm309 = vcmp.eq.s32.totalorder %v277, %v307
  %v310 = vsel %vm308, 1.0, %v274
  %v311 = vsel %vm309, 1.0, %v275
  %v312 = vsel %vm308, 2147483647, %v276
  %v313 = vsel %vm309, 2147483647, %v277
  %v314 = vsel %vm42, %v312, 2147483647
  %v315 = vand.u32 %v314, 65535
  %v316 = vshra.s32 %v314, 16
  %v317 = vcvt.s32.f32 %v315
  %v318 = vcvt.s32.f32 %v316
  %319 = vmin.xlane.f32.xlu0 %v318
  %v320 = vpop.xlane.xlu0 %319
  %vm321 = vcmp.eq.f32.partialorder %v318, %v320
  %v322 = vsel %vm321, %v317, inf
  %323 = vmin.xlane.f32.xlu0 %v322
  %v324 = vpop.xlane.xlu0 %323
  %v325 = vcvt.f32.s32 %v324
  %v326 = vcvt.f32.s32 %v320
  %v327 = vshll.u32 %v326, 16
  %v328 = vadd.s32 %v327, %v325
  %v329 = vsel %vm42, %v313, 2147483647
  %v330 = vand.u32 %v329, 65535
  %v331 = vshra.s32 %v329, 16
  %v332 = vcvt.s32.f32 %v330
  %v333 = vcvt.s32.f32 %v331
  %334 = vmin.xlane.f32.xlu0 %v333
  %v335 = vpop.xlane.xlu0 %334
  %vm336 = vcmp.eq.f32.partialorder %v333, %v335
  %v337 = vsel %vm336, %v332, inf
  %338 = vmin.xlane.f32.xlu0 %v337
  %v339 = vpop.xlane.xlu0 %338
  %v340 = vcvt.f32.s32 %v339
  %v341 = vcvt.f32.s32 %v335
  %v342 = vshll.u32 %v341, 16
  %v343 = vadd.s32 %v342, %v340
  %vm344 = vcmp.eq.s32.totalorder %v312, %v328
  %vm345 = vcmp.eq.s32.totalorder %v313, %v343
  %v346 = vsel %vm344, 1.0, %v310
  %v347 = vsel %vm345, 1.0, %v311
  %v348 = vsub.f32 %v59, %v346
  %v349 = vsub.f32 %v60, %v347
  %v350 = vmul.f32 %v348, %v229
  %v351 = vmul.f32 %v349, %v230
  %v352 = vand.u32 2147483647, %v350
  %v353 = vand.u32 2147483647, %v351
  %v354 = vsel %vm42, %v352, 0.0
  %355 = vadd.xlane.f32.xlu0 %v354
  %v356 = vpop.xlane.xlu0 %355
  %v357 = vsel %vm42, %v353, 0.0
  %358 = vadd.xlane.f32.xlu0 %v357
  %v359 = vpop.xlane.xlu0 %358
  %v360 = vmax.f32 %v356, 1e-12
  %v361 = vmax.f32 %v359, 1e-12
  %v362 = vrcp.pop %v360
  %v363 = vmul.f32 %v350, %v362
  %v364 = vrcp.pop %v361
  %v365 = vmul.f32 %v351, %v364
  %v366 = vand.u32 2147483647, %v363
  %v367 = vand.u32 2147483647, %v365
  %v368 = vsel %vm42, %v366, 0.0
  %v369 = vsel %vm42, %v367, 0.0
  %v370 = vadd.f32 %v368, %v369
  %v371 = vrot.slane %v370, 4
  %v372 = vadd.f32 %v370, %v371
  %v373 = vrot.slane %v372, 2
  %v374 = vadd.f32 %v372, %v373
  %v375 = vrot.slane %v374, 1
  %v376 = vadd.f32 %v374, %v375
  %v377 = vmax.f32 %v376, 1e-12
  %v378 = vrcp.pop %v377
  %v379 = vmul.f32 %v363, %v378
  %v380 = vmul.f32 %v365, %v378
  %381 = vxpose.xlu0.b32.start [1/16] %v379, 128
  %382 = vxpose.xlu0.b32.cont [2/16] %v380, 128
  %383 = vxpose.xlu0.b32.cont [3/16] 0.0, 128
  %384 = vxpose.xlu0.b32.cont [4/16] 0.0, 128
  %385 = vxpose.xlu0.b32.cont [5/16] 0.0, 128
  %386 = vxpose.xlu0.b32.cont [6/16] 0.0, 128
  %387 = vxpose.xlu0.b32.cont [7/16] 0.0, 128
  %388 = vxpose.xlu0.b32.cont [8/16] 0.0, 128
  %389 = vxpose.xlu0.b32.cont [9/16] 0.0, 128
  %390 = vxpose.xlu0.b32.cont [10/16] 0.0, 128
  %391 = vxpose.xlu0.b32.cont [11/16] 0.0, 128
  %392 = vxpose.xlu0.b32.cont [12/16] 0.0, 128
  %393 = vxpose.xlu0.b32.cont [13/16] 0.0, 128
  %394 = vxpose.xlu0.b32.cont [14/16] 0.0, 128
  %395 = vxpose.xlu0.b32.cont [15/16] 0.0, 128
  %396 = vxpose.xlu0.b32.end [16/16] 0.0, 128
  %v397 = vpop.trf.xlu0
  %v398 = vpop.trf.xlu0
  %v399 = vpop.trf.xlu0
  %v400 = vpop.trf.xlu0
  %v401 = vpop.trf.xlu0
  %v402 = vpop.trf.xlu0
  %v403 = vpop.trf.xlu0
  %v404 = vpop.trf.xlu0
  %v405 = vpop.trf.xlu0
  %v406 = vpop.trf.xlu0
  %v407 = vpop.trf.xlu0
  %v408 = vpop.trf.xlu0
  %v409 = vpop.trf.xlu0
  %v410 = vpop.trf.xlu0
  %v411 = vpop.trf.xlu0
  %v412 = vpop.trf.xlu0
  %v414 = vsel %vm42, %v397, 0
  %v417 = vsel %vm42, %v398, 0
  %419 = vmatprep.subr.mxu0 0.0
  %420 = vmatpush1.msra.mxu0 %v20
  %421 = vmatprep.subr.mxu0 0.0
  %422 = vmatpush1.msra.mxu0 %v21
  %423 = vmatprep.subr.mxu0 0.0
  %424 = vmatpush1.msra.mxu0 0.0
  %425 = vmatprep.subr.mxu0 0.0
  %426 = vmatpush1.msra.mxu0 0.0
  %427 = vmatprep.subr.mxu0 0.0
  %428 = vmatpush1.msra.mxu0 0.0
  %429 = vmatprep.subr.mxu0 0.0
  %430 = vmatpush1.msra.mxu0 0.0
  %431 = vmatprep.subr.mxu0 0.0
  %432 = vmatpush1.msra.mxu0 0.0
  %433 = vmatprep.subr.mxu0 0.0
  %434 = vmatpush1.msra.mxu0 0.0
  %435 = vmatprep.subr.mxu0 0.0
  %436 = vmatpush1.msra.mxu0 0.0
  %437 = vmatprep.subr.mxu0 0.0
  %438 = vmatpush1.msra.mxu0 0.0
  %439 = vmatprep.subr.mxu0 0.0
  %440 = vmatpush1.msra.mxu0 0.0
  %441 = vmatprep.subr.mxu0 0.0
  %442 = vmatpush1.msra.mxu0 0.0
  %443 = vmatprep.subr.mxu0 0.0
  %444 = vmatpush1.msra.mxu0 0.0
  %445 = vmatprep.subr.mxu0 0.0
  %446 = vmatpush1.msra.mxu0 0.0
  %447 = vmatprep.subr.mxu0 0.0
  %448 = vmatpush1.msra.mxu0 0.0
  %449 = vmatprep.subr.mxu0 0.0
  %450 = vmatpush1.msra.mxu0 0.0
  %451 = vmatprep.subr.mxu0 0.0
  %452 = vmatpush1.msra.mxu0 0.0
  %453 = vmatprep.subr.mxu0 0.0
  %454 = vmatpush1.msra.mxu0 0.0
  %455 = vmatprep.subr.mxu0 0.0
  %456 = vmatpush1.msra.mxu0 0.0
  %457 = vmatprep.subr.mxu0 0.0
  %458 = vmatpush1.msra.mxu0 0.0
  %459 = vmatprep.subr.mxu0 0.0
  %460 = vmatpush1.msra.mxu0 0.0
  %461 = vmatprep.subr.mxu0 0.0
  %462 = vmatpush1.msra.mxu0 0.0
  %463 = vmatprep.subr.mxu0 0.0
  %464 = vmatpush1.msra.mxu0 0.0
  %465 = vmatprep.subr.mxu0 0.0
  %466 = vmatpush1.msra.mxu0 0.0
  %467 = vmatprep.subr.mxu0 0.0
  %468 = vmatpush1.msra.mxu0 0.0
  %469 = vmatprep.subr.mxu0 0.0
  %470 = vmatpush1.msra.mxu0 0.0
  %471 = vmatprep.subr.mxu0 0.0
  %472 = vmatpush1.msra.mxu0 0.0
  %473 = vmatprep.subr.mxu0 0.0
  %474 = vmatpush1.msra.mxu0 0.0
  %475 = vmatprep.subr.mxu0 0.0
  %476 = vmatpush1.msra.mxu0 0.0
  %477 = vmatprep.subr.mxu0 0.0
  %478 = vmatpush1.msra.mxu0 0.0
  %479 = vmatprep.subr.mxu0 0.0
  %480 = vmatpush1.msra.mxu0 0.0
  %481 = vmatprep.subr.mxu0 0.0
  %482 = vmatpush1.msra.mxu0 0.0
  %483 = vmatprep.mubr.f32.mxu0 0.0
  %484 = vmatmul.mubr.f32.gmra.mrb[0].mxu0 %v414
  %v485 = vpop.f32.mrb[0].mxu0
  %v486 = vadd.f32 0.0, %v485
  %v487 = vpop.f32.mrb[0].mxu0
  %488 = vmatprep.mubr.f32.mxu0 0.0
  %489 = vmatmul.mubr.f32.gmra.mrb[0].mxu0 %v417
  %v490 = vpop.f32.mrb[0].mxu0
  %v491 = vadd.f32 0.0, %v490
  %v492 = vpop.f32.mrb[0].mxu0
  %493 = vdwg.mxu0
  %vm494 = vcmp.eq.f32.partialorder %v45, 0.0
  %vm495 = vcmp.eq.f32.partialorder %v48, 0.0
  %v496 = vsel %vm494, 1, 0
  %v497 = vsel %vm495, 1, 0
  %v498 = vcvt.s32.f32 %v496
  %v499 = vcvt.s32.f32 %v497
  %v500 = vmul.f32 %v379, %v498
  %v501 = vmul.f32 %v380, %v499
  %v502 = vsel %vm42, %v500, 0.0
  %v503 = vsel %vm42, %v501, 0.0
  %v504 = vadd.f32 %v502, %v503
  %v505 = vrot.slane %v504, 4
  %v506 = vadd.f32 %v504, %v505
  %v507 = vrot.slane %v506, 2
  %v508 = vadd.f32 %v506, %v507
  %v509 = vrot.slane %v508, 1
  %v510 = vadd.f32 %v508, %v509
  %vm511 = vcmp.eq.s32.totalorder %v28, 0
  %v512 = vsel %vm511, %v510, 0.0
  %vm513 = vcmp.eq.f32.partialorder %v45, 1.0
  %vm514 = vcmp.eq.f32.partialorder %v48, 1.0
  %v515 = vsel %vm513, 1, 0
  %v516 = vsel %vm514, 1, 0
  %v517 = vcvt.s32.f32 %v515
  %v518 = vcvt.s32.f32 %v516
  %v519 = vmul.f32 %v379, %v517
  %v520 = vmul.f32 %v380, %v518
  %v521 = vsel %vm42, %v519, 0.0
  %v522 = vsel %vm42, %v520, 0.0
  %v523 = vadd.f32 %v521, %v522
  %v524 = vrot.slane %v523, 4
  %v525 = vadd.f32 %v523, %v524
  %v526 = vrot.slane %v525, 2
  %v527 = vadd.f32 %v525, %v526
  %v528 = vrot.slane %v527, 1
  %v529 = vadd.f32 %v527, %v528
  %vm530 = vcmp.eq.s32.totalorder %v28, 1
  %v531 = vsel %vm530, %v529, %v512
  %v532 = vadd.f32 %v24, %v531
  %v533 = vmul.f32 %v22, 0.99
  %v534 = vmul.f32 %v23, 0.99
  %v535 = vmul.f32 %v486, 0.01
  %v536 = vmul.f32 %v491, 0.01
  %v537 = vadd.f32 %v533, %v535
  %v538 = vadd.f32 %v534, %v536
  %v539 = vmul.f32 %v537, %v537
  %v540 = vmul.f32 %v538, %v538
  %541 = vadd.xlane.f32.xlu0 %v539
  %v542 = vpop.xlane.xlu0 %541
  %543 = vadd.xlane.f32.xlu0 %v540
  %v544 = vpop.xlane.xlu0 %543
  %v545 = vmax.f32 %v542, 1e-24
  %v546 = vmax.f32 %v544, 1e-24
  %v547 = vrsqrt.pop %v545
  %v548 = vrsqrt.pop %v546
  %v549 = vmul.f32 %v537, %v547
  %v550 = vmul.f32 %v538, %v548
  %551 = vmatprep.subr.mxu0 0.0
  %552 = vmatpush1.xpose.msra.mxu0 %v549
  %553 = vmatprep.subr.mxu0 0.0
  %554 = vmatpush1.xpose.msra.mxu0 %v550
  %555 = vmatprep.subr.mxu0 0.0
  %556 = vmatpush1.xpose.msra.mxu0 0.0
  %557 = vmatprep.subr.mxu0 0.0
  %558 = vmatpush1.xpose.msra.mxu0 0.0
  %559 = vmatprep.subr.mxu0 0.0
  %560 = vmatpush1.xpose.msra.mxu0 0.0
  %561 = vmatprep.subr.mxu0 0.0
  %562 = vmatpush1.xpose.msra.mxu0 0.0
  %563 = vmatprep.subr.mxu0 0.0
  %564 = vmatpush1.xpose.msra.mxu0 0.0
  %565 = vmatprep.subr.mxu0 0.0
  %566 = vmatpush1.xpose.msra.mxu0 0.0
  %567 = vmatprep.subr.mxu0 0.0
  %568 = vmatpush1.xpose.msra.mxu0 0.0
  %569 = vmatprep.subr.mxu0 0.0
  %570 = vmatpush1.xpose.msra.mxu0 0.0
  %571 = vmatprep.subr.mxu0 0.0
  %572 = vmatpush1.xpose.msra.mxu0 0.0
  %573 = vmatprep.subr.mxu0 0.0
  %574 = vmatpush1.xpose.msra.mxu0 0.0
  %575 = vmatprep.subr.mxu0 0.0
  %576 = vmatpush1.xpose.msra.mxu0 0.0
  %577 = vmatprep.subr.mxu0 0.0
  %578 = vmatpush1.xpose.msra.mxu0 0.0
  %579 = vmatprep.subr.mxu0 0.0
  %580 = vmatpush1.xpose.msra.mxu0 0.0
  %581 = vmatprep.subr.mxu0 0.0
  %582 = vmatpush1.xpose.msra.mxu0 0.0
  %583 = vmatprep.subr.mxu0 0.0
  %584 = vmatpush1.xpose.msra.mxu0 0.0
  %585 = vmatprep.subr.mxu0 0.0
  %586 = vmatpush1.xpose.msra.mxu0 0.0
  %587 = vmatprep.subr.mxu0 0.0
  %588 = vmatpush1.xpose.msra.mxu0 0.0
  %589 = vmatprep.subr.mxu0 0.0
  %590 = vmatpush1.xpose.msra.mxu0 0.0
  %591 = vmatprep.subr.mxu0 0.0
  %592 = vmatpush1.xpose.msra.mxu0 0.0
  %593 = vmatprep.subr.mxu0 0.0
  %594 = vmatpush1.xpose.msra.mxu0 0.0
  %595 = vmatprep.subr.mxu0 0.0
  %596 = vmatpush1.xpose.msra.mxu0 0.0
  %597 = vmatprep.subr.mxu0 0.0
  %598 = vmatpush1.xpose.msra.mxu0 0.0
  %599 = vmatprep.subr.mxu0 0.0
  %600 = vmatpush1.xpose.msra.mxu0 0.0
  %601 = vmatprep.subr.mxu0 0.0
  %602 = vmatpush1.xpose.msra.mxu0 0.0
  %603 = vmatprep.subr.mxu0 0.0
  %604 = vmatpush1.xpose.msra.mxu0 0.0
  %605 = vmatprep.subr.mxu0 0.0
  %606 = vmatpush1.xpose.msra.mxu0 0.0
  %607 = vmatprep.subr.mxu0 0.0
  %608 = vmatpush1.xpose.msra.mxu0 0.0
  %609 = vmatprep.subr.mxu0 0.0
  %610 = vmatpush1.xpose.msra.mxu0 0.0
  %611 = vmatprep.subr.mxu0 0.0
  %612 = vmatpush1.xpose.msra.mxu0 0.0
  %613 = vmatprep.subr.mxu0 0.0
  %614 = vmatpush1.xpose.msra.mxu0 0.0
  %615 = vmatprep.mubr.f32.mxu0 0.0
  %616 = vmatmul.mubr.f32.gmra.mrb[0].mxu0 %v20
  %v617 = vpop.f32.mrb[0].mxu0
  %v618 = vadd.f32 0.0, %v617
  %v619 = vpop.f32.mrb[0].mxu0
  %620 = vmatprep.mubr.f32.mxu0 0.0
  %621 = vmatmul.mubr.f32.gmra.mrb[0].mxu0 %v21
  %v622 = vpop.f32.mrb[0].mxu0
  %v623 = vadd.f32 0.0, %v622
  %v624 = vpop.f32.mrb[0].mxu0
  %625 = vdwg.mxu0
  %v626 = vmul.f32 %v618, 20.0
  %v627 = vmul.f32 %v623, 20.0
  %v628 = vmul.f32 %v626, 1.442695
  %v629 = vpow.pop %v628
  %v630 = vmul.f32 %v627, 1.442695
  %v631 = vpow.pop %v630
  %v632 = vand.u32 2147483647, %v629
  %v633 = vand.u32 2147483647, %v631
  %v634 = vsel %vm42, %v632, 0.0
  %v635 = vsel %vm42, %v633, 0.0
  %v636 = vadd.f32 %v634, %v635
  %v637 = vrot.slane %v636, 4
  %v638 = vadd.f32 %v636, %v637
  %v639 = vrot.slane %v638, 2
  %v640 = vadd.f32 %v638, %v639
  %v641 = vrot.slane %v640, 1
  %v642 = vadd.f32 %v640, %v641
  %v643 = vmax.f32 %v642, 1e-12
  %v644 = vrcp.pop %v643
  %v645 = vmul.f32 %v629, %v644
  %v646 = vmul.f32 %v631, %v644
  %v647 = vand.u32 2147483647, %v645
  %v648 = vand.u32 2147483647, %v646
  %v649 = vsel %vm42, %v647, 0.0
  %650 = vadd.xlane.f32.xlu0 %v649
  %v651 = vpop.xlane.xlu0 %650
  %v652 = vsel %vm42, %v648, 0.0
  %653 = vadd.xlane.f32.xlu0 %v652
  %v654 = vpop.xlane.xlu0 %653
  %v655 = vmax.f32 %v651, 1e-12
  %v656 = vmax.f32 %v654, 1e-12
  %v657 = vrcp.pop %v655
  %v658 = vmul.f32 %v645, %v657
  %v659 = vrcp.pop %v656
  %v660 = vmul.f32 %v646, %v659
  %v661 = vand.u32 2147483647, %v658
  %v662 = vand.u32 2147483647, %v660
  %v663 = vsel %vm42, %v661, 0.0
  %v664 = vsel %vm42, %v662, 0.0
  %v665 = vadd.f32 %v663, %v664
  %v666 = vrot.slane %v665, 4
  %v667 = vadd.f32 %v665, %v666
  %v668 = vrot.slane %v667, 2
  %v669 = vadd.f32 %v667, %v668
  %v670 = vrot.slane %v669, 1
  %v671 = vadd.f32 %v669, %v670
  %v672 = vmax.f32 %v671, 1e-12
  %v673 = vrcp.pop %v672
  %v674 = vmul.f32 %v658, %v673
  %v675 = vmul.f32 %v660, %v673
  %v676 = vand.u32 2147483647, %v674
  %v677 = vand.u32 2147483647, %v675
  %v678 = vsel %vm42, %v676, 0.0
  %679 = vadd.xlane.f32.xlu0 %v678
  %v680 = vpop.xlane.xlu0 %679
  %v681 = vsel %vm42, %v677, 0.0
  %682 = vadd.xlane.f32.xlu0 %v681
  %v683 = vpop.xlane.xlu0 %682
  %v684 = vmax.f32 %v680, 1e-12
  %v685 = vmax.f32 %v683, 1e-12
  %v686 = vrcp.pop %v684
  %v687 = vmul.f32 %v674, %v686
  %v688 = vrcp.pop %v685
  %v689 = vmul.f32 %v675, %v688
  %v690 = vand.u32 2147483647, %v687
  %v691 = vand.u32 2147483647, %v689
  %v692 = vsel %vm42, %v690, 0.0
  %v693 = vsel %vm42, %v691, 0.0
  %v694 = vadd.f32 %v692, %v693
  %v695 = vrot.slane %v694, 4
  %v696 = vadd.f32 %v694, %v695
  %v697 = vrot.slane %v696, 2
  %v698 = vadd.f32 %v696, %v697
  %v699 = vrot.slane %v698, 1
  %v700 = vadd.f32 %v698, %v699
  %v701 = vmax.f32 %v700, 1e-12
  %v702 = vrcp.pop %v701
  %v703 = vmul.f32 %v687, %v702
  %v704 = vmul.f32 %v689, %v702
  %v705 = vand.u32 2147483647, %v703
  %v706 = vand.u32 2147483647, %v704
  %v707 = vsel %vm42, %v705, 0.0
  %708 = vadd.xlane.f32.xlu0 %v707
  %v709 = vpop.xlane.xlu0 %708
  %v710 = vsel %vm42, %v706, 0.0
  %711 = vadd.xlane.f32.xlu0 %v710
  %v712 = vpop.xlane.xlu0 %711
  %v713 = vmax.f32 %v709, 1e-12
  %v714 = vmax.f32 %v712, 1e-12
  %v715 = vrcp.pop %v713
  %v716 = vmul.f32 %v703, %v715
  %v717 = vrcp.pop %v714
  %v718 = vmul.f32 %v704, %v717
  %v719 = vmul.f32 %v618, 10.0
  %v720 = vmul.f32 %v623, 10.0
  %v721 = vmul.f32 %v59, %v716
  %v722 = vmul.f32 %v60, %v718
  %v723 = vmul.f32 %v348, %v721
  %v724 = vmul.f32 %v349, %v722
  %v725 = vand.u32 2147483647, %v723
  %v726 = vand.u32 2147483647, %v724
  %v727 = vsel %vm42, %v725, 0.0
  %728 = vadd.xlane.f32.xlu0 %v727
  %v729 = vpop.xlane.xlu0 %728
  %v730 = vsel %vm42, %v726, 0.0
  %731 = vadd.xlane.f32.xlu0 %v730
  %v732 = vpop.xlane.xlu0 %731
  %v733 = vmax.f32 %v729, 1e-12
  %v734 = vmax.f32 %v732, 1e-12
  %v735 = vrcp.pop %v733
  %v736 = vmul.f32 %v723, %v735
  %v737 = vrcp.pop %v734
  %v738 = vmul.f32 %v724, %v737
  %v739 = vmul.f32 %v736, %v719
  %v740 = vmul.f32 %v738, %v720
  %v741 = vsel %vm42, %v739, 0.0
  %742 = vadd.xlane.f32.xlu0 %v741
  %v743 = vpop.xlane.xlu0 %742
  %v744 = vsel %vm42, %v740, 0.0
  %745 = vadd.xlane.f32.xlu0 %v744
  %v746 = vpop.xlane.xlu0 %745
  %v747 = vsel %vm42, %v719, -inf
  %748 = vmax.xlane.f32.xlu0 %v747
  %v749 = vpop.xlane.xlu0 %748
  %v750 = vsel %vm42, %v720, -inf
  %751 = vmax.xlane.f32.xlu0 %v750
  %v752 = vpop.xlane.xlu0 %751
  %v753 = vsub.f32 %v719, %v749
  %v754 = vsub.f32 %v720, %v752
  %v755 = vmul.f32 %v753, 1.442695
  %v756 = vpow.pop %v755
  %v757 = vmul.f32 %v754, 1.442695
  %v758 = vpow.pop %v757
  %v759 = vsel %vm42, %v756, 0.0
  %760 = vadd.xlane.f32.xlu0 %v759
  %v761 = vpop.xlane.xlu0 %760
  %v762 = vsel %vm42, %v758, 0.0
  %763 = vadd.xlane.f32.xlu0 %v762
  %v764 = vpop.xlane.xlu0 %763
  %v765 = vlog2.pop %v761
  %v766 = vmul.f32 %v765, 0.6931472
  %v767 = vlog2.pop %v764
  %v768 = vmul.f32 %v767, 0.6931472
  %v769 = vadd.f32 %v749, %v766
  %v770 = vadd.f32 %v752, %v768
  %vm771 = vcmask 7168
  %v772 = vsel %vm771, %v769, 0.0
  %v773 = vsel %vm771, %v770, 0.0
  %v774 = vadd.f32 %v772, %v773
  %775 = vadd.xlane.f32.xlu0 %v774
  %v776 = vpop.xlane.xlu0 %775
  %v777 = vrot.slane %v776, 4
  %v778 = vadd.f32 %v776, %v777
  %v779 = vrot.slane %v778, 2
  %v780 = vadd.f32 %v778, %v779
  %v781 = vrot.slane %v780, 1
  %v782 = vadd.f32 %v780, %v781
  %s783 = vtos %v782
  %v784 = vrcp.pop 16.0
  %s785 = vtos %v784
  %s786 = smul.f32 %s783, %s785
  %v787 = vsel %vm771, %v743, 0.0
  %v788 = vsel %vm771, %v746, 0.0
  %v789 = vadd.f32 %v787, %v788
  %790 = vadd.xlane.f32.xlu0 %v789
  %v791 = vpop.xlane.xlu0 %790
  %v792 = vrot.slane %v791, 4
  %v793 = vadd.f32 %v791, %v792
  %v794 = vrot.slane %v793, 2
  %v795 = vadd.f32 %v793, %v794
  %v796 = vrot.slane %v795, 1
  %v797 = vadd.f32 %v795, %v796
  %s798 = vtos %v797
  %v799 = vrcp.pop 16.0
  %s800 = vtos %v799
  %s801 = smul.f32 %s798, %s800
  %s802 = ssub.f32 %s786, %s801
  %805 = vrot.lane.b32.xlu0 %v128, 112
  %v806 = vpop.permute.xlu0 %805
  %807 = vrot.lane.b32.xlu0 %v133, 112
  %v808 = vpop.permute.xlu0 %807
  %v811 = vsel %vm32, %v806, 0.0
  %v812 = vsel %vm33, %v808, 0.0
  %v813 = vsel %vm42, %v811, 0.0
  %814 = vadd.xlane.f32.xlu0 %v813
  %v815 = vpop.xlane.xlu0 %814
  %v816 = vsel %vm42, %v812, 0.0
  %817 = vadd.xlane.f32.xlu0 %v816
  %v818 = vpop.xlane.xlu0 %817
  %v819 = vadd.f32 %v813, %v816
  %v820 = vrot.slane %v819, 4
  %v821 = vadd.f32 %v819, %v820
  %v822 = vrot.slane %v821, 2
  %v823 = vadd.f32 %v821, %v822
  %v824 = vrot.slane %v823, 1
  %v825 = vadd.f32 %v823, %v824
  %v826 = vmax.f32 %v815, 1e-24
  %v827 = vmax.f32 %v818, 1e-24
  %v828 = vrsqrt.pop %v826
  %v829 = vrsqrt.pop %v827
  %v830 = vmax.f32 %v825, 1e-24
  %v831 = vrsqrt.pop %v830
  %v832 = vmul.f32 %v828, %v831
  %v833 = vmul.f32 %v829, %v831
  %836 = vrot.lane.b32.xlu0 %v832, 16
  %v837 = vpop.permute.xlu0 %836
  %838 = vrot.lane.b32.xlu0 %v833, 16
  %v839 = vpop.permute.xlu0 %838
  %v842 = vmul.f32 %v128, %v837
  %v843 = vmul.f32 %v133, %v839
  %v844 = vmul.f32 %v842, 2.0
  %v845 = vmul.f32 %v843, 2.0
  %vm846 = vcmask 261248
  %v847 = vsel %vm846, %v844, -inf
  %848 = vmax.xlane.f32.xlu0 %v847
  %v849 = vpop.xlane.xlu0 %848
  %v850 = vsel %vm846, %v845, -inf
  %851 = vmax.xlane.f32.xlu0 %v850
  %v852 = vpop.xlane.xlu0 %851
  %v853 = vsub.f32 %v844, %v849
  %v854 = vsub.f32 %v845, %v852
  %v855 = vsel %vm32, 0.0, 1.0
  %v856 = vsel %vm33, 0.0, 1.0
  %vm857 = vcmp.eq.f32.partialorder %v45, %v38
  %vm858 = vcmp.eq.f32.partialorder %v48, %v38
  %v859 = vsel %vm857, 1, 0
  %v860 = vsel %vm858, 1, 0
  %v861 = vcvt.s32.f32 %v859
  %v862 = vcvt.s32.f32 %v860
  %v863 = vmul.f32 %v861, %v855
  %v864 = vmul.f32 %v862, %v856
  %v865 = vmul.f32 %v853, 1.442695
  %v866 = vpow.pop %v865
  %v867 = vmul.f32 %v854, 1.442695
  %v868 = vpow.pop %v867
  %871 = vrot.lane.b32.xlu0 %v855, 16
  %v872 = vpop.permute.xlu0 %871
  %873 = vrot.lane.b32.xlu0 %v856, 16
  %v874 = vpop.permute.xlu0 %873
  %v877 = vmul.f32 %v866, %v872
  %v878 = vmul.f32 %v868, %v874
  %881 = vrot.lane.b32.xlu0 %v877, 112
  %v882 = vpop.permute.xlu0 %881
  %883 = vrot.lane.b32.xlu0 %v878, 112
  %v884 = vpop.permute.xlu0 %883
  %v887 = vsel %vm42, %v882, 0.0
  %888 = vadd.xlane.f32.xlu0 %v887
  %v889 = vpop.xlane.xlu0 %888
  %v890 = vsel %vm42, %v884, 0.0
  %891 = vadd.xlane.f32.xlu0 %v890
  %v892 = vpop.xlane.xlu0 %891
  %v893 = vadd.f32 %v889, 1e-06
  %v894 = vadd.f32 %v892, 1e-06
  %v895 = vlog2.pop %v893
  %v896 = vmul.f32 %v895, 0.6931472
  %v897 = vlog2.pop %v894
  %v898 = vmul.f32 %v897, 0.6931472
  %v899 = vsel %vm42, %v863, 0.0
  %900 = vadd.xlane.f32.xlu0 %v899
  %v901 = vpop.xlane.xlu0 %900
  %v902 = vsel %vm42, %v864, 0.0
  %903 = vadd.xlane.f32.xlu0 %v902
  %v904 = vpop.xlane.xlu0 %903
  %v905 = vmax.f32 %v901, 1e-06
  %v906 = vmax.f32 %v904, 1e-06
  %909 = vrot.lane.b32.xlu0 %v853, 112
  %v910 = vpop.permute.xlu0 %909
  %911 = vrot.lane.b32.xlu0 %v854, 112
  %v912 = vpop.permute.xlu0 %911
  %v915 = vmul.f32 %v863, %v910
  %v916 = vmul.f32 %v864, %v912
  %v917 = vsel %vm42, %v915, 0.0
  %918 = vadd.xlane.f32.xlu0 %v917
  %v919 = vpop.xlane.xlu0 %918
  %v920 = vsel %vm42, %v916, 0.0
  %921 = vadd.xlane.f32.xlu0 %v920
  %v922 = vpop.xlane.xlu0 %921
  %v923 = vrcp.pop %v905
  %v924 = vmul.f32 %v919, %v923
  %v925 = vrcp.pop %v906
  %v926 = vmul.f32 %v922, %v925
  %v927 = vsub.f32 %v924, %v896
  %v928 = vsub.f32 %v926, %v898
  %v929 = vsel %vm771, %v927, 0.0
  %v930 = vsel %vm771, %v928, 0.0
  %v931 = vadd.f32 %v929, %v930
  %932 = vadd.xlane.f32.xlu0 %v931
  %v933 = vpop.xlane.xlu0 %932
  %v934 = vrot.slane %v933, 4
  %v935 = vadd.f32 %v933, %v934
  %v936 = vrot.slane %v935, 2
  %v937 = vadd.f32 %v935, %v936
  %v938 = vrot.slane %v937, 1
  %v939 = vadd.f32 %v937, %v938
  %s940 = vtos %v939
  %v941 = vrcp.pop 16.0
  %s942 = vtos %v941
  %s943 = smul.f32 %s940, %s942
  %s944 = ssub.f32 0.0, %s943
  %s945 = sadd.f32 %s802, %s944
  %946 = vst [vmem:[%s5] sm:$0xff] %v549
  %947 = vst [vmem:[%s5 + $0x8] sm:$0xff] %v550
  %vm948 = vcmask 123904
  %949 = vst.msk [vmem:[%s6] sm:$0x3] %vm948, %v532
  %vm950 = vcmp.eq.s32.totalorder %v31, 0
  %vm951 = vcmp.eq.s32.totalorder %v31, 1
  %vm952 = vcmp.eq.s32.totalorder %v31, 2
  %v953 = vstv %s944
  %v954 = vsel %vm952, %v953, 0.0
  %v955 = vstv %s802
  %v956 = vsel %vm951, %v955, %v954
  %v957 = vstv %s945
  %v958 = vsel %vm950, %v957, %v956
  %959 = vst [vmem:[%s4] sm:$0x1] %v958
  // Predicated region
  $region18: #{_palm_forward_jit.1} parent=0 // pred_check
    _
  $region19: #{_palm_forward_jit.1} parent=0 // pred_check_branch
    %961 = sbr.rel (0) target = $region21
  $region20: #{_palm_forward_jit.1} parent=0 // pred_region
    _
  $region21: #{_palm_forward_jit.1} parent=0 // pred_fallthru
    _
  // Predicated region
  $region22: #{_palm_forward_jit.1} parent=0 // pred_check
    _
  $region23: #{_palm_forward_jit.1} parent=0 // pred_check_branch
    %963 = sbr.rel (0) target = $region25
  $region24: #{_palm_forward_jit.1} parent=0 // pred_region
    _
  $region25: #{_palm_forward_jit.1} parent=0 // pred_fallthru
    _
  // Predicated region
  $region26: #{_palm_forward_jit.1} parent=0 // pred_check
    _
  $region27: #{_palm_forward_jit.1} parent=0 // pred_check_branch
    %965 = sbr.rel (0) target = $region29
  $region28: #{_palm_forward_jit.1} parent=0 // pred_region
    _
  $region29: #{_palm_forward_jit.1} parent=0 // pred_fallthru
    _
  // Predicated region
  $region30: #{_palm_forward_jit.1} parent=0 // pred_check
    _
  $region31: #{_palm_forward_jit.1} parent=0 // pred_check_branch
    %967 = sbr.rel (0) target = $region33
  $region32: #{_palm_forward_jit.1} parent=0 // pred_region
    _
  $region33: #{_palm_forward_jit.1} parent=0 // pred_fallthru
    _
  // Predicated region
  $region34: #{_palm_forward_jit.1} parent=0 // pred_check
    _
  $region35: #{_palm_forward_jit.1} parent=0 // pred_check_branch
    %969 = sbr.rel (0) target = $region37
  $region36: #{_palm_forward_jit.1} parent=0 // pred_region
    _
  $region37: #{_palm_forward_jit.1} parent=0 // pred_fallthru
    _
  // Predicated region
  $region38: #{_palm_forward_jit.1} parent=0 // pred_check
    _
  $region39: #{_palm_forward_jit.1} parent=0 // pred_check_branch
    %971 = sbr.rel (0) target = $region41
  $region40: #{_palm_forward_jit.1} parent=0 // pred_region
    _
  $region41: #{_palm_forward_jit.1} parent=0 // pred_fallthru
    _

</llo_original>
